<compile_context>
chip_gen: v6e
topology: v6e:2x2x1
jax: 0.10.0
libtpu: 0.0.40
codegen_flags: <defaults>
</compile_context>

<pallas_src>
import jax
import jax.numpy as jnp
import numpy as np
from jax.experimental import pallas as pl
from jax.experimental.pallas import tpu as pltpu


def _lstm_cell(gates, c, H):
    """gates: (B, 4H) f32 pre-activations in PyTorch order i,f,g,o. Returns (h, c)."""
    sig = jax.nn.sigmoid(gates)          # one full-vreg sigmoid (g lanes discarded)
    i_g = sig[:, 0:H]
    f_g = sig[:, H:2 * H]
    o_g = sig[:, 3 * H:4 * H]
    g_g = jnp.tanh(gates[:, 2 * H:3 * H])
    c = f_g * c + i_g * g_g
    h = o_g * jnp.tanh(c)
    return h, c


def make_lstm_fc_kernel(n_layers: int, hidden_dim: int, batch_pad: int, seq_len: int):
    """n_layers LSTM over a time-major (T*B_pad, feat) slab + Linear(H -> 26)."""
    H, B, T = hidden_dim, batch_pad, seq_len

    def kernel(x_ref, h0_ref, c0_ref, *refs):
        # refs = [w_ih_T(bf16), w_hh_T(bf16), bias(f32)] * n_layers, fc_w_T, fc_b, out
        out_ref = refs[-1]            # (B, 26)
        fc_b = refs[-2][...]          # (1, 26) f32
        fc_w_t = refs[-3][...]        # (H, 26) f32
        layer_refs = refs[:-3]

        # ---------------- layer 0 ----------------
        w_ih0 = layer_refs[0][...]    # (D, 4H) bf16
        w_hh0 = layer_refs[1][...]    # (H, 4H) bf16
        b0 = layer_refs[2][...]       # (1, 4H) f32 == b_ih + b_hh

        # Hoisted input projection for ALL timesteps: one MXU call, bias folded in.
        precomp0 = jnp.dot(x_ref[...], w_ih0,
                           preferred_element_type=jnp.float32) + b0   # (T*B, 4H) f32

        h = h0_ref[0]                 # (B, H) f32
        c = c0_ref[0]                 # (B, H) f32
        hs = []                       # per-timestep layer-0 hidden states (vregs)
        for t in range(T):
            pre = precomp0[t * B:(t + 1) * B, :]          # sublane-aligned (B=8) slice
            gates = pre + jnp.dot(h.astype(jnp.bfloat16), w_hh0,
                                  preferred_element_type=jnp.float32)
            h, c = _lstm_cell(gates, c, H)
            hs.append(h)

        # ---------------- layers 1..L-1 (wavefront DAG) ----------------
        for l in range(1, n_layers):
            w_ih = layer_refs[3 * l][...]       # (H, 4H) bf16
            w_hh = layer_refs[3 * l + 1][...]   # (H, 4H) bf16
            b = layer_refs[3 * l + 2][...]      # (1, 4H) f32
            h = h0_ref[l]
            c = c0_ref[l]
            new_hs = []
            for t in range(T):
                # Input-projection dot depends only on the layer below at time t, so it
                # is off this layer's recurrent critical path (scheduler overlaps it).
                inp = jnp.dot(hs[t].astype(jnp.bfloat16), w_ih,
                              preferred_element_type=jnp.float32)
                rec = jnp.dot(h.astype(jnp.bfloat16), w_hh,
                              preferred_element_type=jnp.float32)
                gates = inp + rec + b
                h, c = _lstm_cell(gates, c, H)
                new_hs.append(h)
            hs = new_hs

        # fc(out[:, -1, :]) — only the last timestep of the top layer is needed.
        out_ref[...] = jnp.dot(hs[-1], fc_w_t,
                               preferred_element_type=jnp.float32) + fc_b

    return kernel


def pack_params(params, n_layers):
    """One-time packing of PyTorch-layout weights into kernel layout (bf16 matmul RHS)."""
    packed = []
    for l in range(n_layers):
        w_ih, w_hh, b_ih, b_hh = params[f"layer{l}"]
        packed += [
            jnp.asarray(w_ih.T, jnp.bfloat16),                       # (in_feat, 4H)
            jnp.asarray(w_hh.T, jnp.bfloat16),                       # (H, 4H)
            jnp.asarray((b_ih + b_hh).reshape(1, -1), jnp.float32),  # (1, 4H)
        ]
    fc_w, fc_b = params["fc"]
    packed += [
        jnp.asarray(fc_w.T, jnp.float32),               # (H, 26)
        jnp.asarray(fc_b.reshape(1, -1), jnp.float32),  # (1, 26)
    ]
    return packed


def net_forward(x, packed_params, init_h, init_c, *, n_layers, hidden_dim, out_dim=26):
    """x: (B, input_dim, T) float32 (PyTorch layout). Returns (B, 26) float32."""
    B, D, T = x.shape
    B_pad = ((max(B, 1) + 7) // 8) * 8   # sublane-align per-step row offsets

    # (B, D, T) -> time-major (T, B, D) -> zero-pad batch -> lane-dense (T*B_pad, D)
    x_tm = jnp.transpose(x, (2, 0, 1)).astype(jnp.float32)
    x_tm = jnp.pad(x_tm, ((0, 0), (0, B_pad - B), (0, 0)))
    x_slab = x_tm.reshape(T * B_pad, D).astype(jnp.bfloat16)

    h0 = jnp.pad(init_h.astype(jnp.float32), ((0, 0), (0, B_pad - B), (0, 0)))
    c0 = jnp.pad(init_c.astype(jnp.float32), ((0, 0), (0, B_pad - B), (0, 0)))

    inputs = [x_slab, h0, c0] + list(packed_params)
    kernel = make_lstm_fc_kernel(n_layers, hidden_dim, B_pad, T)
    out_pad = pl.pallas_call(
        kernel,
        out_shape=jax.ShapeDtypeStruct((B_pad, out_dim), jnp.float32),
        in_specs=[pl.BlockSpec(memory_space=pltpu.MemorySpace.VMEM)] * len(inputs),
        out_specs=pl.BlockSpec(memory_space=pltpu.MemorySpace.VMEM),
    )(*inputs)
    return out_pad[:B]


def reference_forward(x, params, init_h, init_c, *, n_layers, hidden_dim,
                      matmul_dtype=jnp.float32):
    """Pure-JAX reference (mirrors PyTorch nn.LSTM semantics).

    matmul_dtype lets us match the kernel's bf16 matmul-operand precision while
    keeping all cell math and accumulation in f32 (same as the kernel).
    """
    def mm(a, b):
        return jnp.dot(a.astype(matmul_dtype), b.astype(matmul_dtype),
                       preferred_element_type=jnp.float32)

    x = jnp.transpose(x, (0, 2, 1))   # (B, T, D)
    B, T, _ = x.shape
    H = hidden_dim
    layer_in = x
    for l in range(n_layers):
        w_ih, w_hh, b_ih, b_hh = params[f"layer{l}"]
        h, c = init_h[l], init_c[l]
        outs = []
        for t in range(T):
            gates = mm(layer_in[:, t, :], w_ih.T) + b_ih + mm(h, w_hh.T) + b_hh
            i_g = jax.nn.sigmoid(gates[:, 0:H])
            f_g = jax.nn.sigmoid(gates[:, H:2 * H])
            g_g = jnp.tanh(gates[:, 2 * H:3 * H])
            o_g = jax.nn.sigmoid(gates[:, 3 * H:4 * H])
            c = f_g * c + i_g * g_g
            h = o_g * jnp.tanh(c)
            outs.append(h)
        layer_in = jnp.stack(outs, axis=1)
    fc_w, fc_b = params["fc"]
    return layer_in[:, -1, :] @ fc_w.T + fc_b   # fc stays f32, like the kernel


def init_params(key, input_dim, hidden_dim, n_layers, out_dim=26):
    params = {}
    k = 1.0 / np.sqrt(hidden_dim)
    for l in range(n_layers):
        in_feat = input_dim if l == 0 else hidden_dim
        key, k1, k2, k3, k4 = jax.random.split(key, 5)
        params[f"layer{l}"] = (
            jax.random.uniform(k1, (4 * hidden_dim, in_feat), jnp.float32, -k, k),
            jax.random.uniform(k2, (4 * hidden_dim, hidden_dim), jnp.float32, -k, k),
            jax.random.uniform(k3, (4 * hidden_dim,), jnp.float32, -k, k),
            jax.random.uniform(k4, (4 * hidden_dim,), jnp.float32, -k, k),
        )
    key, k1, k2 = jax.random.split(key, 3)
    params["fc"] = (
        jax.random.uniform(k1, (out_dim, hidden_dim), jnp.float32, -k, k),
        jax.random.uniform(k2, (out_dim,), jnp.float32, -k, k),
    )
    return params, key


if __name__ == "__main__":
    # Shapes consistent with the module's forward:
    #   x: (batch=2, input_dim=4, seq=8), hidden_dim=32, n_layers=2 -> output (2, 26)
    B, D, T, H, L = 2, 4, 8, 32, 2

    root = jax.random.PRNGKey(0)
    params, root = init_params(root, D, H, L)
    packed = pack_params(params, L)          # one-time setup-time packing (bf16 RHS)

    root, kx, kh, kc = jax.random.split(root, 4)
    x = jax.random.normal(kx, (B, D, T), jnp.float32)
    # TODO(synk): the PyTorch forward() draws fresh torch.randn init_h/init_c per call;
    # deterministic JAX-random stand-ins are used here so the result is verifiable.
    init_h = jax.random.normal(kh, (L, B, H), jnp.float32)
    init_c = jax.random.normal(kc, (L, B, H), jnp.float32)

    out = net_forward(x, packed, init_h, init_c, n_layers=L, hidden_dim=H)
    out = jax.block_until_ready(out)
    assert out.shape == (B, 26), out.shape

    # Reference at matched (bf16-operand) matmul precision -> tight check of semantics.
    ref = reference_forward(x, params, init_h, init_c, n_layers=L, hidden_dim=H,
                            matmul_dtype=jnp.bfloat16)
    np.testing.assert_allclose(np.asarray(out), np.asarray(ref), rtol=5e-3, atol=5e-3)

    print("KERNEL_OK")
</pallas_src>

<mosaic_0001>
module attributes {stable_mosaic.version = 11 : i64} {
  func.func @kernel(%arg0: memref<64x4xbf16, #tpu.memory_space<vmem>>, %arg1: memref<2x8x32xf32, #tpu.memory_space<vmem>>, %arg2: memref<2x8x32xf32, #tpu.memory_space<vmem>>, %arg3: memref<4x128xbf16, #tpu.memory_space<vmem>>, %arg4: memref<32x128xbf16, #tpu.memory_space<vmem>>, %arg5: memref<1x128xf32, #tpu.memory_space<vmem>>, %arg6: memref<32x128xbf16, #tpu.memory_space<vmem>>, %arg7: memref<32x128xbf16, #tpu.memory_space<vmem>>, %arg8: memref<1x128xf32, #tpu.memory_space<vmem>>, %arg9: memref<32x26xf32, #tpu.memory_space<vmem>>, %arg10: memref<1x26xf32, #tpu.memory_space<vmem>>, %arg11: memref<8x26xf32, #tpu.memory_space<vmem>>) attributes {dimension_semantics = [], scalar_prefetch = 0 : i64, scratch_operands = 0 : i64, tpu.core_type = #tpu.core_type<tc>} {
    %c0 = arith.constant 0 : index
    %c0_0 = arith.constant 0 : index
    %0 = vector.load %arg10[%c0, %c0_0] : memref<1x26xf32, #tpu.memory_space<vmem>>, vector<1x26xf32>
    %c0_1 = arith.constant 0 : index
    %c0_2 = arith.constant 0 : index
    %1 = vector.load %arg9[%c0_1, %c0_2] : memref<32x26xf32, #tpu.memory_space<vmem>>, vector<32x26xf32>
    %c0_3 = arith.constant 0 : index
    %c0_4 = arith.constant 0 : index
    %2 = vector.load %arg3[%c0_3, %c0_4] : memref<4x128xbf16, #tpu.memory_space<vmem>>, vector<4x128xbf16>
    %c0_5 = arith.constant 0 : index
    %c0_6 = arith.constant 0 : index
    %3 = vector.load %arg4[%c0_5, %c0_6] : memref<32x128xbf16, #tpu.memory_space<vmem>>, vector<32x128xbf16>
    %c0_7 = arith.constant 0 : index
    %c0_8 = arith.constant 0 : index
    %4 = vector.load %arg5[%c0_7, %c0_8] : memref<1x128xf32, #tpu.memory_space<vmem>>, vector<1x128xf32>
    %c0_9 = arith.constant 0 : index
    %c0_10 = arith.constant 0 : index
    %5 = vector.load %arg0[%c0_9, %c0_10] : memref<64x4xbf16, #tpu.memory_space<vmem>>, vector<64x4xbf16>
    %cst = arith.constant dense<0.000000e+00> : vector<64x128xf32>
    %6 = tpu.matmul %5, %2, %cst {dimension_numbers = #tpu.dot_dimension_numbers<[1], [0], [0], [1], [0, 0, 1, 1], [], []>} : vector<64x4xbf16>, vector<4x128xbf16>, vector<64x128xf32> -> vector<64x128xf32>
    %7 = vector.broadcast %4 : vector<1x128xf32> to vector<64x128xf32>
    %8 = arith.addf %6, %7 : vector<64x128xf32>
    %c0_11 = arith.constant 0 : index
    %c0_12 = arith.constant 0 : index
    %c0_13 = arith.constant 0 : index
    %9 = vector.load %arg1[%c0_11, %c0_12, %c0_13] : memref<2x8x32xf32, #tpu.memory_space<vmem>>, vector<1x8x32xf32>
    %10 = vector.shape_cast %9 : vector<1x8x32xf32> to vector<8x32xf32>
    %c0_14 = arith.constant 0 : index
    %c0_15 = arith.constant 0 : index
    %c0_16 = arith.constant 0 : index
    %11 = vector.load %arg2[%c0_14, %c0_15, %c0_16] : memref<2x8x32xf32, #tpu.memory_space<vmem>>, vector<1x8x32xf32>
    %12 = vector.shape_cast %11 : vector<1x8x32xf32> to vector<8x32xf32>
    %13 = vector.extract_strided_slice %8 {offsets = [0, 0], sizes = [8, 128], strides = [1, 1]} : vector<64x128xf32> to vector<8x128xf32>
    %14 = arith.truncf %10 : vector<8x32xf32> to vector<8x32xbf16>
    %cst_17 = arith.constant dense<0.000000e+00> : vector<8x128xf32>
    %15 = tpu.matmul %14, %3, %cst_17 {dimension_numbers = #tpu.dot_dimension_numbers<[1], [0], [0], [1], [0, 0, 1, 1], [], []>} : vector<8x32xbf16>, vector<32x128xbf16>, vector<8x128xf32> -> vector<8x128xf32>
    %16 = arith.addf %13, %15 : vector<8x128xf32>
    %17 = arith.negf %16 : vector<8x128xf32>
    %18 = math.exp %17 : vector<8x128xf32>
    %cst_18 = arith.constant 1.000000e+00 : f32
    %19 = vector.broadcast %cst_18 : f32 to vector<8x128xf32>
    %20 = arith.addf %19, %18 : vector<8x128xf32>
    %21 = arith.divf %19, %20 : vector<8x128xf32>
    %22 = vector.extract_strided_slice %21 {offsets = [0, 0], sizes = [8, 32], strides = [1, 1]} : vector<8x128xf32> to vector<8x32xf32>
    %23 = vector.extract_strided_slice %21 {offsets = [0, 32], sizes = [8, 32], strides = [1, 1]} : vector<8x128xf32> to vector<8x32xf32>
    %24 = vector.extract_strided_slice %21 {offsets = [0, 96], sizes = [8, 32], strides = [1, 1]} : vector<8x128xf32> to vector<8x32xf32>
    %25 = vector.extract_strided_slice %16 {offsets = [0, 64], sizes = [8, 32], strides = [1, 1]} : vector<8x128xf32> to vector<8x32xf32>
    %26 = math.tanh %25 : vector<8x32xf32>
    %27 = arith.mulf %23, %12 : vector<8x32xf32>
    %28 = arith.mulf %22, %26 : vector<8x32xf32>
    %29 = arith.addf %27, %28 : vector<8x32xf32>
    %30 = math.tanh %29 : vector<8x32xf32>
    %31 = arith.mulf %24, %30 : vector<8x32xf32>
    %32 = vector.extract_strided_slice %8 {offsets = [8, 0], sizes = [8, 128], strides = [1, 1]} : vector<64x128xf32> to vector<8x128xf32>
    %33 = arith.truncf %31 : vector<8x32xf32> to vector<8x32xbf16>
    %cst_19 = arith.constant dense<0.000000e+00> : vector<8x128xf32>
    %34 = tpu.matmul %33, %3, %cst_19 {dimension_numbers = #tpu.dot_dimension_numbers<[1], [0], [0], [1], [0, 0, 1, 1], [], []>} : vector<8x32xbf16>, vector<32x128xbf16>, vector<8x128xf32> -> vector<8x128xf32>
    %35 = arith.addf %32, %34 : vector<8x128xf32>
    %36 = arith.negf %35 : vector<8x128xf32>
    %37 = math.exp %36 : vector<8x128xf32>
    %cst_20 = arith.constant 1.000000e+00 : f32
    %38 = vector.broadcast %cst_20 : f32 to vector<8x128xf32>
    %39 = arith.addf %38, %37 : vector<8x128xf32>
    %40 = arith.divf %38, %39 : vector<8x128xf32>
    %41 = vector.extract_strided_slice %40 {offsets = [0, 0], sizes = [8, 32], strides = [1, 1]} : vector<8x128xf32> to vector<8x32xf32>
    %42 = vector.extract_strided_slice %40 {offsets = [0, 32], sizes = [8, 32], strides = [1, 1]} : vector<8x128xf32> to vector<8x32xf32>
    %43 = vector.extract_strided_slice %40 {offsets = [0, 96], sizes = [8, 32], strides = [1, 1]} : vector<8x128xf32> to vector<8x32xf32>
    %44 = vector.extract_strided_slice %35 {offsets = [0, 64], sizes = [8, 32], strides = [1, 1]} : vector<8x128xf32> to vector<8x32xf32>
    %45 = math.tanh %44 : vector<8x32xf32>
    %46 = arith.mulf %42, %29 : vector<8x32xf32>
    %47 = arith.mulf %41, %45 : vector<8x32xf32>
    %48 = arith.addf %46, %47 : vector<8x32xf32>
    %49 = math.tanh %48 : vector<8x32xf32>
    %50 = arith.mulf %43, %49 : vector<8x32xf32>
    %51 = vector.extract_strided_slice %8 {offsets = [16, 0], sizes = [8, 128], strides = [1, 1]} : vector<64x128xf32> to vector<8x128xf32>
    %52 = arith.truncf %50 : vector<8x32xf32> to vector<8x32xbf16>
    %cst_21 = arith.constant dense<0.000000e+00> : vector<8x128xf32>
    %53 = tpu.matmul %52, %3, %cst_21 {dimension_numbers = #tpu.dot_dimension_numbers<[1], [0], [0], [1], [0, 0, 1, 1], [], []>} : vector<8x32xbf16>, vector<32x128xbf16>, vector<8x128xf32> -> vector<8x128xf32>
    %54 = arith.addf %51, %53 : vector<8x128xf32>
    %55 = arith.negf %54 : vector<8x128xf32>
    %56 = math.exp %55 : vector<8x128xf32>
    %cst_22 = arith.constant 1.000000e+00 : f32
    %57 = vector.broadcast %cst_22 : f32 to vector<8x128xf32>
    %58 = arith.addf %57, %56 : vector<8x128xf32>
    %59 = arith.divf %57, %58 : vector<8x128xf32>
    %60 = vector.extract_strided_slice %59 {offsets = [0, 0], sizes = [8, 32], strides = [1, 1]} : vector<8x128xf32> to vector<8x32xf32>
    %61 = vector.extract_strided_slice %59 {offsets = [0, 32], sizes = [8, 32], strides = [1, 1]} : vector<8x128xf32> to vector<8x32xf32>
    %62 = vector.extract_strided_slice %59 {offsets = [0, 96], sizes = [8, 32], strides = [1, 1]} : vector<8x128xf32> to vector<8x32xf32>
    %63 = vector.extract_strided_slice %54 {offsets = [0, 64], sizes = [8, 32], strides = [1, 1]} : vector<8x128xf32> to vector<8x32xf32>
    %64 = math.tanh %63 : vector<8x32xf32>
    %65 = arith.mulf %61, %48 : vector<8x32xf32>
    %66 = arith.mulf %60, %64 : vector<8x32xf32>
    %67 = arith.addf %65, %66 : vector<8x32xf32>
    %68 = math.tanh %67 : vector<8x32xf32>
    %69 = arith.mulf %62, %68 : vector<8x32xf32>
    %70 = vector.extract_strided_slice %8 {offsets = [24, 0], sizes = [8, 128], strides = [1, 1]} : vector<64x128xf32> to vector<8x128xf32>
    %71 = arith.truncf %69 : vector<8x32xf32> to vector<8x32xbf16>
    %cst_23 = arith.constant dense<0.000000e+00> : vector<8x128xf32>
    %72 = tpu.matmul %71, %3, %cst_23 {dimension_numbers = #tpu.dot_dimension_numbers<[1], [0], [0], [1], [0, 0, 1, 1], [], []>} : vector<8x32xbf16>, vector<32x128xbf16>, vector<8x128xf32> -> vector<8x128xf32>
    %73 = arith.addf %70, %72 : vector<8x128xf32>
    %74 = arith.negf %73 : vector<8x128xf32>
    %75 = math.exp %74 : vector<8x128xf32>
    %cst_24 = arith.constant 1.000000e+00 : f32
    %76 = vector.broadcast %cst_24 : f32 to vector<8x128xf32>
    %77 = arith.addf %76, %75 : vector<8x128xf32>
    %78 = arith.divf %76, %77 : vector<8x128xf32>
    %79 = vector.extract_strided_slice %78 {offsets = [0, 0], sizes = [8, 32], strides = [1, 1]} : vector<8x128xf32> to vector<8x32xf32>
    %80 = vector.extract_strided_slice %78 {offsets = [0, 32], sizes = [8, 32], strides = [1, 1]} : vector<8x128xf32> to vector<8x32xf32>
    %81 = vector.extract_strided_slice %78 {offsets = [0, 96], sizes = [8, 32], strides = [1, 1]} : vector<8x128xf32> to vector<8x32xf32>
    %82 = vector.extract_strided_slice %73 {offsets = [0, 64], sizes = [8, 32], strides = [1, 1]} : vector<8x128xf32> to vector<8x32xf32>
    %83 = math.tanh %82 : vector<8x32xf32>
    %84 = arith.mulf %80, %67 : vector<8x32xf32>
    %85 = arith.mulf %79, %83 : vector<8x32xf32>
    %86 = arith.addf %84, %85 : vector<8x32xf32>
    %87 = math.tanh %86 : vector<8x32xf32>
    %88 = arith.mulf %81, %87 : vector<8x32xf32>
    %89 = vector.extract_strided_slice %8 {offsets = [32, 0], sizes = [8, 128], strides = [1, 1]} : vector<64x128xf32> to vector<8x128xf32>
    %90 = arith.truncf %88 : vector<8x32xf32> to vector<8x32xbf16>
    %cst_25 = arith.constant dense<0.000000e+00> : vector<8x128xf32>
    %91 = tpu.matmul %90, %3, %cst_25 {dimension_numbers = #tpu.dot_dimension_numbers<[1], [0], [0], [1], [0, 0, 1, 1], [], []>} : vector<8x32xbf16>, vector<32x128xbf16>, vector<8x128xf32> -> vector<8x128xf32>
    %92 = arith.addf %89, %91 : vector<8x128xf32>
    %93 = arith.negf %92 : vector<8x128xf32>
    %94 = math.exp %93 : vector<8x128xf32>
    %cst_26 = arith.constant 1.000000e+00 : f32
    %95 = vector.broadcast %cst_26 : f32 to vector<8x128xf32>
    %96 = arith.addf %95, %94 : vector<8x128xf32>
    %97 = arith.divf %95, %96 : vector<8x128xf32>
    %98 = vector.extract_strided_slice %97 {offsets = [0, 0], sizes = [8, 32], strides = [1, 1]} : vector<8x128xf32> to vector<8x32xf32>
    %99 = vector.extract_strided_slice %97 {offsets = [0, 32], sizes = [8, 32], strides = [1, 1]} : vector<8x128xf32> to vector<8x32xf32>
    %100 = vector.extract_strided_slice %97 {offsets = [0, 96], sizes = [8, 32], strides = [1, 1]} : vector<8x128xf32> to vector<8x32xf32>
    %101 = vector.extract_strided_slice %92 {offsets = [0, 64], sizes = [8, 32], strides = [1, 1]} : vector<8x128xf32> to vector<8x32xf32>
    %102 = math.tanh %101 : vector<8x32xf32>
    %103 = arith.mulf %99, %86 : vector<8x32xf32>
    %104 = arith.mulf %98, %102 : vector<8x32xf32>
    %105 = arith.addf %103, %104 : vector<8x32xf32>
    %106 = math.tanh %105 : vector<8x32xf32>
    %107 = arith.mulf %100, %106 : vector<8x32xf32>
    %108 = vector.extract_strided_slice %8 {offsets = [40, 0], sizes = [8, 128], strides = [1, 1]} : vector<64x128xf32> to vector<8x128xf32>
    %109 = arith.truncf %107 : vector<8x32xf32> to vector<8x32xbf16>
    %cst_27 = arith.constant dense<0.000000e+00> : vector<8x128xf32>
    %110 = tpu.matmul %109, %3, %cst_27 {dimension_numbers = #tpu.dot_dimension_numbers<[1], [0], [0], [1], [0, 0, 1, 1], [], []>} : vector<8x32xbf16>, vector<32x128xbf16>, vector<8x128xf32> -> vector<8x128xf32>
    %111 = arith.addf %108, %110 : vector<8x128xf32>
    %112 = arith.negf %111 : vector<8x128xf32>
    %113 = math.exp %112 : vector<8x128xf32>
    %cst_28 = arith.constant 1.000000e+00 : f32
    %114 = vector.broadcast %cst_28 : f32 to vector<8x128xf32>
    %115 = arith.addf %114, %113 : vector<8x128xf32>
    %116 = arith.divf %114, %115 : vector<8x128xf32>
    %117 = vector.extract_strided_slice %116 {offsets = [0, 0], sizes = [8, 32], strides = [1, 1]} : vector<8x128xf32> to vector<8x32xf32>
    %118 = vector.extract_strided_slice %116 {offsets = [0, 32], sizes = [8, 32], strides = [1, 1]} : vector<8x128xf32> to vector<8x32xf32>
    %119 = vector.extract_strided_slice %116 {offsets = [0, 96], sizes = [8, 32], strides = [1, 1]} : vector<8x128xf32> to vector<8x32xf32>
    %120 = vector.extract_strided_slice %111 {offsets = [0, 64], sizes = [8, 32], strides = [1, 1]} : vector<8x128xf32> to vector<8x32xf32>
    %121 = math.tanh %120 : vector<8x32xf32>
    %122 = arith.mulf %118, %105 : vector<8x32xf32>
    %123 = arith.mulf %117, %121 : vector<8x32xf32>
    %124 = arith.addf %122, %123 : vector<8x32xf32>
    %125 = math.tanh %124 : vector<8x32xf32>
    %126 = arith.mulf %119, %125 : vector<8x32xf32>
    %127 = vector.extract_strided_slice %8 {offsets = [48, 0], sizes = [8, 128], strides = [1, 1]} : vector<64x128xf32> to vector<8x128xf32>
    %128 = arith.truncf %126 : vector<8x32xf32> to vector<8x32xbf16>
    %cst_29 = arith.constant dense<0.000000e+00> : vector<8x128xf32>
    %129 = tpu.matmul %128, %3, %cst_29 {dimension_numbers = #tpu.dot_dimension_numbers<[1], [0], [0], [1], [0, 0, 1, 1], [], []>} : vector<8x32xbf16>, vector<32x128xbf16>, vector<8x128xf32> -> vector<8x128xf32>
    %130 = arith.addf %127, %129 : vector<8x128xf32>
    %131 = arith.negf %130 : vector<8x128xf32>
    %132 = math.exp %131 : vector<8x128xf32>
    %cst_30 = arith.constant 1.000000e+00 : f32
    %133 = vector.broadcast %cst_30 : f32 to vector<8x128xf32>
    %134 = arith.addf %133, %132 : vector<8x128xf32>
    %135 = arith.divf %133, %134 : vector<8x128xf32>
    %136 = vector.extract_strided_slice %135 {offsets = [0, 0], sizes = [8, 32], strides = [1, 1]} : vector<8x128xf32> to vector<8x32xf32>
    %137 = vector.extract_strided_slice %135 {offsets = [0, 32], sizes = [8, 32], strides = [1, 1]} : vector<8x128xf32> to vector<8x32xf32>
    %138 = vector.extract_strided_slice %135 {offsets = [0, 96], sizes = [8, 32], strides = [1, 1]} : vector<8x128xf32> to vector<8x32xf32>
    %139 = vector.extract_strided_slice %130 {offsets = [0, 64], sizes = [8, 32], strides = [1, 1]} : vector<8x128xf32> to vector<8x32xf32>
    %140 = math.tanh %139 : vector<8x32xf32>
    %141 = arith.mulf %137, %124 : vector<8x32xf32>
    %142 = arith.mulf %136, %140 : vector<8x32xf32>
    %143 = arith.addf %141, %142 : vector<8x32xf32>
    %144 = math.tanh %143 : vector<8x32xf32>
    %145 = arith.mulf %138, %144 : vector<8x32xf32>
    %146 = vector.extract_strided_slice %8 {offsets = [56, 0], sizes = [8, 128], strides = [1, 1]} : vector<64x128xf32> to vector<8x128xf32>
    %147 = arith.truncf %145 : vector<8x32xf32> to vector<8x32xbf16>
    %cst_31 = arith.constant dense<0.000000e+00> : vector<8x128xf32>
    %148 = tpu.matmul %147, %3, %cst_31 {dimension_numbers = #tpu.dot_dimension_numbers<[1], [0], [0], [1], [0, 0, 1, 1], [], []>} : vector<8x32xbf16>, vector<32x128xbf16>, vector<8x128xf32> -> vector<8x128xf32>
    %149 = arith.addf %146, %148 : vector<8x128xf32>
    %150 = arith.negf %149 : vector<8x128xf32>
    %151 = math.exp %150 : vector<8x128xf32>
    %cst_32 = arith.constant 1.000000e+00 : f32
    %152 = vector.broadcast %cst_32 : f32 to vector<8x128xf32>
    %153 = arith.addf %152, %151 : vector<8x128xf32>
    %154 = arith.divf %152, %153 : vector<8x128xf32>
    %155 = vector.extract_strided_slice %154 {offsets = [0, 0], sizes = [8, 32], strides = [1, 1]} : vector<8x128xf32> to vector<8x32xf32>
    %156 = vector.extract_strided_slice %154 {offsets = [0, 32], sizes = [8, 32], strides = [1, 1]} : vector<8x128xf32> to vector<8x32xf32>
    %157 = vector.extract_strided_slice %154 {offsets = [0, 96], sizes = [8, 32], strides = [1, 1]} : vector<8x128xf32> to vector<8x32xf32>
    %158 = vector.extract_strided_slice %149 {offsets = [0, 64], sizes = [8, 32], strides = [1, 1]} : vector<8x128xf32> to vector<8x32xf32>
    %159 = math.tanh %158 : vector<8x32xf32>
    %160 = arith.mulf %156, %143 : vector<8x32xf32>
    %161 = arith.mulf %155, %159 : vector<8x32xf32>
    %162 = arith.addf %160, %161 : vector<8x32xf32>
    %163 = math.tanh %162 : vector<8x32xf32>
    %164 = arith.mulf %157, %163 : vector<8x32xf32>
    %c0_33 = arith.constant 0 : index
    %c0_34 = arith.constant 0 : index
    %165 = vector.load %arg6[%c0_33, %c0_34] : memref<32x128xbf16, #tpu.memory_space<vmem>>, vector<32x128xbf16>
    %c0_35 = arith.constant 0 : index
    %c0_36 = arith.constant 0 : index
    %166 = vector.load %arg7[%c0_35, %c0_36] : memref<32x128xbf16, #tpu.memory_space<vmem>>, vector<32x128xbf16>
    %c0_37 = arith.constant 0 : index
    %c0_38 = arith.constant 0 : index
    %167 = vector.load %arg8[%c0_37, %c0_38] : memref<1x128xf32, #tpu.memory_space<vmem>>, vector<1x128xf32>
    %c1 = arith.constant 1 : index
    %c0_39 = arith.constant 0 : index
    %c0_40 = arith.constant 0 : index
    %168 = vector.load %arg1[%c1, %c0_39, %c0_40] : memref<2x8x32xf32, #tpu.memory_space<vmem>>, vector<1x8x32xf32>
    %169 = vector.shape_cast %168 : vector<1x8x32xf32> to vector<8x32xf32>
    %c1_41 = arith.constant 1 : index
    %c0_42 = arith.constant 0 : index
    %c0_43 = arith.constant 0 : index
    %170 = vector.load %arg2[%c1_41, %c0_42, %c0_43] : memref<2x8x32xf32, #tpu.memory_space<vmem>>, vector<1x8x32xf32>
    %171 = vector.shape_cast %170 : vector<1x8x32xf32> to vector<8x32xf32>
    %172 = arith.truncf %31 : vector<8x32xf32> to vector<8x32xbf16>
    %cst_44 = arith.constant dense<0.000000e+00> : vector<8x128xf32>
    %173 = tpu.matmul %172, %165, %cst_44 {dimension_numbers = #tpu.dot_dimension_numbers<[1], [0], [0], [1], [0, 0, 1, 1], [], []>} : vector<8x32xbf16>, vector<32x128xbf16>, vector<8x128xf32> -> vector<8x128xf32>
    %174 = arith.truncf %169 : vector<8x32xf32> to vector<8x32xbf16>
    %cst_45 = arith.constant dense<0.000000e+00> : vector<8x128xf32>
    %175 = tpu.matmul %174, %166, %cst_45 {dimension_numbers = #tpu.dot_dimension_numbers<[1], [0], [0], [1], [0, 0, 1, 1], [], []>} : vector<8x32xbf16>, vector<32x128xbf16>, vector<8x128xf32> -> vector<8x128xf32>
    %176 = arith.addf %173, %175 : vector<8x128xf32>
    %177 = vector.broadcast %167 : vector<1x128xf32> to vector<8x128xf32>
    %178 = arith.addf %176, %177 : vector<8x128xf32>
    %179 = arith.negf %178 : vector<8x128xf32>
    %180 = math.exp %179 : vector<8x128xf32>
    %cst_46 = arith.constant 1.000000e+00 : f32
    %181 = vector.broadcast %cst_46 : f32 to vector<8x128xf32>
    %182 = arith.addf %181, %180 : vector<8x128xf32>
    %183 = arith.divf %181, %182 : vector<8x128xf32>
    %184 = vector.extract_strided_slice %183 {offsets = [0, 0], sizes = [8, 32], strides = [1, 1]} : vector<8x128xf32> to vector<8x32xf32>
    %185 = vector.extract_strided_slice %183 {offsets = [0, 32], sizes = [8, 32], strides = [1, 1]} : vector<8x128xf32> to vector<8x32xf32>
    %186 = vector.extract_strided_slice %183 {offsets = [0, 96], sizes = [8, 32], strides = [1, 1]} : vector<8x128xf32> to vector<8x32xf32>
    %187 = vector.extract_strided_slice %178 {offsets = [0, 64], sizes = [8, 32], strides = [1, 1]} : vector<8x128xf32> to vector<8x32xf32>
    %188 = math.tanh %187 : vector<8x32xf32>
    %189 = arith.mulf %185, %171 : vector<8x32xf32>
    %190 = arith.mulf %184, %188 : vector<8x32xf32>
    %191 = arith.addf %189, %190 : vector<8x32xf32>
    %192 = math.tanh %191 : vector<8x32xf32>
    %193 = arith.mulf %186, %192 : vector<8x32xf32>
    %194 = arith.truncf %50 : vector<8x32xf32> to vector<8x32xbf16>
    %cst_47 = arith.constant dense<0.000000e+00> : vector<8x128xf32>
    %195 = tpu.matmul %194, %165, %cst_47 {dimension_numbers = #tpu.dot_dimension_numbers<[1], [0], [0], [1], [0, 0, 1, 1], [], []>} : vector<8x32xbf16>, vector<32x128xbf16>, vector<8x128xf32> -> vector<8x128xf32>
    %196 = arith.truncf %193 : vector<8x32xf32> to vector<8x32xbf16>
    %cst_48 = arith.constant dense<0.000000e+00> : vector<8x128xf32>
    %197 = tpu.matmul %196, %166, %cst_48 {dimension_numbers = #tpu.dot_dimension_numbers<[1], [0], [0], [1], [0, 0, 1, 1], [], []>} : vector<8x32xbf16>, vector<32x128xbf16>, vector<8x128xf32> -> vector<8x128xf32>
    %198 = arith.addf %195, %197 : vector<8x128xf32>
    %199 = vector.broadcast %167 : vector<1x128xf32> to vector<8x128xf32>
    %200 = arith.addf %198, %199 : vector<8x128xf32>
    %201 = arith.negf %200 : vector<8x128xf32>
    %202 = math.exp %201 : vector<8x128xf32>
    %cst_49 = arith.constant 1.000000e+00 : f32
    %203 = vector.broadcast %cst_49 : f32 to vector<8x128xf32>
    %204 = arith.addf %203, %202 : vector<8x128xf32>
    %205 = arith.divf %203, %204 : vector<8x128xf32>
    %206 = vector.extract_strided_slice %205 {offsets = [0, 0], sizes = [8, 32], strides = [1, 1]} : vector<8x128xf32> to vector<8x32xf32>
    %207 = vector.extract_strided_slice %205 {offsets = [0, 32], sizes = [8, 32], strides = [1, 1]} : vector<8x128xf32> to vector<8x32xf32>
    %208 = vector.extract_strided_slice %205 {offsets = [0, 96], sizes = [8, 32], strides = [1, 1]} : vector<8x128xf32> to vector<8x32xf32>
    %209 = vector.extract_strided_slice %200 {offsets = [0, 64], sizes = [8, 32], strides = [1, 1]} : vector<8x128xf32> to vector<8x32xf32>
    %210 = math.tanh %209 : vector<8x32xf32>
    %211 = arith.mulf %207, %191 : vector<8x32xf32>
    %212 = arith.mulf %206, %210 : vector<8x32xf32>
    %213 = arith.addf %211, %212 : vector<8x32xf32>
    %214 = math.tanh %213 : vector<8x32xf32>
    %215 = arith.mulf %208, %214 : vector<8x32xf32>
    %216 = arith.truncf %69 : vector<8x32xf32> to vector<8x32xbf16>
    %cst_50 = arith.constant dense<0.000000e+00> : vector<8x128xf32>
    %217 = tpu.matmul %216, %165, %cst_50 {dimension_numbers = #tpu.dot_dimension_numbers<[1], [0], [0], [1], [0, 0, 1, 1], [], []>} : vector<8x32xbf16>, vector<32x128xbf16>, vector<8x128xf32> -> vector<8x128xf32>
    %218 = arith.truncf %215 : vector<8x32xf32> to vector<8x32xbf16>
    %cst_51 = arith.constant dense<0.000000e+00> : vector<8x128xf32>
    %219 = tpu.matmul %218, %166, %cst_51 {dimension_numbers = #tpu.dot_dimension_numbers<[1], [0], [0], [1], [0, 0, 1, 1], [], []>} : vector<8x32xbf16>, vector<32x128xbf16>, vector<8x128xf32> -> vector<8x128xf32>
    %220 = arith.addf %217, %219 : vector<8x128xf32>
    %221 = vector.broadcast %167 : vector<1x128xf32> to vector<8x128xf32>
    %222 = arith.addf %220, %221 : vector<8x128xf32>
    %223 = arith.negf %222 : vector<8x128xf32>
    %224 = math.exp %223 : vector<8x128xf32>
    %cst_52 = arith.constant 1.000000e+00 : f32
    %225 = vector.broadcast %cst_52 : f32 to vector<8x128xf32>
    %226 = arith.addf %225, %224 : vector<8x128xf32>
    %227 = arith.divf %225, %226 : vector<8x128xf32>
    %228 = vector.extract_strided_slice %227 {offsets = [0, 0], sizes = [8, 32], strides = [1, 1]} : vector<8x128xf32> to vector<8x32xf32>
    %229 = vector.extract_strided_slice %227 {offsets = [0, 32], sizes = [8, 32], strides = [1, 1]} : vector<8x128xf32> to vector<8x32xf32>
    %230 = vector.extract_strided_slice %227 {offsets = [0, 96], sizes = [8, 32], strides = [1, 1]} : vector<8x128xf32> to vector<8x32xf32>
    %231 = vector.extract_strided_slice %222 {offsets = [0, 64], sizes = [8, 32], strides = [1, 1]} : vector<8x128xf32> to vector<8x32xf32>
    %232 = math.tanh %231 : vector<8x32xf32>
    %233 = arith.mulf %229, %213 : vector<8x32xf32>
    %234 = arith.mulf %228, %232 : vector<8x32xf32>
    %235 = arith.addf %233, %234 : vector<8x32xf32>
    %236 = math.tanh %235 : vector<8x32xf32>
    %237 = arith.mulf %230, %236 : vector<8x32xf32>
    %238 = arith.truncf %88 : vector<8x32xf32> to vector<8x32xbf16>
    %cst_53 = arith.constant dense<0.000000e+00> : vector<8x128xf32>
    %239 = tpu.matmul %238, %165, %cst_53 {dimension_numbers = #tpu.dot_dimension_numbers<[1], [0], [0], [1], [0, 0, 1, 1], [], []>} : vector<8x32xbf16>, vector<32x128xbf16>, vector<8x128xf32> -> vector<8x128xf32>
    %240 = arith.truncf %237 : vector<8x32xf32> to vector<8x32xbf16>
    %cst_54 = arith.constant dense<0.000000e+00> : vector<8x128xf32>
    %241 = tpu.matmul %240, %166, %cst_54 {dimension_numbers = #tpu.dot_dimension_numbers<[1], [0], [0], [1], [0, 0, 1, 1], [], []>} : vector<8x32xbf16>, vector<32x128xbf16>, vector<8x128xf32> -> vector<8x128xf32>
    %242 = arith.addf %239, %241 : vector<8x128xf32>
    %243 = vector.broadcast %167 : vector<1x128xf32> to vector<8x128xf32>
    %244 = arith.addf %242, %243 : vector<8x128xf32>
    %245 = arith.negf %244 : vector<8x128xf32>
    %246 = math.exp %245 : vector<8x128xf32>
    %cst_55 = arith.constant 1.000000e+00 : f32
    %247 = vector.broadcast %cst_55 : f32 to vector<8x128xf32>
    %248 = arith.addf %247, %246 : vector<8x128xf32>
    %249 = arith.divf %247, %248 : vector<8x128xf32>
    %250 = vector.extract_strided_slice %249 {offsets = [0, 0], sizes = [8, 32], strides = [1, 1]} : vector<8x128xf32> to vector<8x32xf32>
    %251 = vector.extract_strided_slice %249 {offsets = [0, 32], sizes = [8, 32], strides = [1, 1]} : vector<8x128xf32> to vector<8x32xf32>
    %252 = vector.extract_strided_slice %249 {offsets = [0, 96], sizes = [8, 32], strides = [1, 1]} : vector<8x128xf32> to vector<8x32xf32>
    %253 = vector.extract_strided_slice %244 {offsets = [0, 64], sizes = [8, 32], strides = [1, 1]} : vector<8x128xf32> to vector<8x32xf32>
    %254 = math.tanh %253 : vector<8x32xf32>
    %255 = arith.mulf %251, %235 : vector<8x32xf32>
    %256 = arith.mulf %250, %254 : vector<8x32xf32>
    %257 = arith.addf %255, %256 : vector<8x32xf32>
    %258 = math.tanh %257 : vector<8x32xf32>
    %259 = arith.mulf %252, %258 : vector<8x32xf32>
    %260 = arith.truncf %107 : vector<8x32xf32> to vector<8x32xbf16>
    %cst_56 = arith.constant dense<0.000000e+00> : vector<8x128xf32>
    %261 = tpu.matmul %260, %165, %cst_56 {dimension_numbers = #tpu.dot_dimension_numbers<[1], [0], [0], [1], [0, 0, 1, 1], [], []>} : vector<8x32xbf16>, vector<32x128xbf16>, vector<8x128xf32> -> vector<8x128xf32>
    %262 = arith.truncf %259 : vector<8x32xf32> to vector<8x32xbf16>
    %cst_57 = arith.constant dense<0.000000e+00> : vector<8x128xf32>
    %263 = tpu.matmul %262, %166, %cst_57 {dimension_numbers = #tpu.dot_dimension_numbers<[1], [0], [0], [1], [0, 0, 1, 1], [], []>} : vector<8x32xbf16>, vector<32x128xbf16>, vector<8x128xf32> -> vector<8x128xf32>
    %264 = arith.addf %261, %263 : vector<8x128xf32>
    %265 = vector.broadcast %167 : vector<1x128xf32> to vector<8x128xf32>
    %266 = arith.addf %264, %265 : vector<8x128xf32>
    %267 = arith.negf %266 : vector<8x128xf32>
    %268 = math.exp %267 : vector<8x128xf32>
    %cst_58 = arith.constant 1.000000e+00 : f32
    %269 = vector.broadcast %cst_58 : f32 to vector<8x128xf32>
    %270 = arith.addf %269, %268 : vector<8x128xf32>
    %271 = arith.divf %269, %270 : vector<8x128xf32>
    %272 = vector.extract_strided_slice %271 {offsets = [0, 0], sizes = [8, 32], strides = [1, 1]} : vector<8x128xf32> to vector<8x32xf32>
    %273 = vector.extract_strided_slice %271 {offsets = [0, 32], sizes = [8, 32], strides = [1, 1]} : vector<8x128xf32> to vector<8x32xf32>
    %274 = vector.extract_strided_slice %271 {offsets = [0, 96], sizes = [8, 32], strides = [1, 1]} : vector<8x128xf32> to vector<8x32xf32>
    %275 = vector.extract_strided_slice %266 {offsets = [0, 64], sizes = [8, 32], strides = [1, 1]} : vector<8x128xf32> to vector<8x32xf32>
    %276 = math.tanh %275 : vector<8x32xf32>
    %277 = arith.mulf %273, %257 : vector<8x32xf32>
    %278 = arith.mulf %272, %276 : vector<8x32xf32>
    %279 = arith.addf %277, %278 : vector<8x32xf32>
    %280 = math.tanh %279 : vector<8x32xf32>
    %281 = arith.mulf %274, %280 : vector<8x32xf32>
    %282 = arith.truncf %126 : vector<8x32xf32> to vector<8x32xbf16>
    %cst_59 = arith.constant dense<0.000000e+00> : vector<8x128xf32>
    %283 = tpu.matmul %282, %165, %cst_59 {dimension_numbers = #tpu.dot_dimension_numbers<[1], [0], [0], [1], [0, 0, 1, 1], [], []>} : vector<8x32xbf16>, vector<32x128xbf16>, vector<8x128xf32> -> vector<8x128xf32>
    %284 = arith.truncf %281 : vector<8x32xf32> to vector<8x32xbf16>
    %cst_60 = arith.constant dense<0.000000e+00> : vector<8x128xf32>
    %285 = tpu.matmul %284, %166, %cst_60 {dimension_numbers = #tpu.dot_dimension_numbers<[1], [0], [0], [1], [0, 0, 1, 1], [], []>} : vector<8x32xbf16>, vector<32x128xbf16>, vector<8x128xf32> -> vector<8x128xf32>
    %286 = arith.addf %283, %285 : vector<8x128xf32>
    %287 = vector.broadcast %167 : vector<1x128xf32> to vector<8x128xf32>
    %288 = arith.addf %286, %287 : vector<8x128xf32>
    %289 = arith.negf %288 : vector<8x128xf32>
    %290 = math.exp %289 : vector<8x128xf32>
    %cst_61 = arith.constant 1.000000e+00 : f32
    %291 = vector.broadcast %cst_61 : f32 to vector<8x128xf32>
    %292 = arith.addf %291, %290 : vector<8x128xf32>
    %293 = arith.divf %291, %292 : vector<8x128xf32>
    %294 = vector.extract_strided_slice %293 {offsets = [0, 0], sizes = [8, 32], strides = [1, 1]} : vector<8x128xf32> to vector<8x32xf32>
    %295 = vector.extract_strided_slice %293 {offsets = [0, 32], sizes = [8, 32], strides = [1, 1]} : vector<8x128xf32> to vector<8x32xf32>
    %296 = vector.extract_strided_slice %293 {offsets = [0, 96], sizes = [8, 32], strides = [1, 1]} : vector<8x128xf32> to vector<8x32xf32>
    %297 = vector.extract_strided_slice %288 {offsets = [0, 64], sizes = [8, 32], strides = [1, 1]} : vector<8x128xf32> to vector<8x32xf32>
    %298 = math.tanh %297 : vector<8x32xf32>
    %299 = arith.mulf %295, %279 : vector<8x32xf32>
    %300 = arith.mulf %294, %298 : vector<8x32xf32>
    %301 = arith.addf %299, %300 : vector<8x32xf32>
    %302 = math.tanh %301 : vector<8x32xf32>
    %303 = arith.mulf %296, %302 : vector<8x32xf32>
    %304 = arith.truncf %145 : vector<8x32xf32> to vector<8x32xbf16>
    %cst_62 = arith.constant dense<0.000000e+00> : vector<8x128xf32>
    %305 = tpu.matmul %304, %165, %cst_62 {dimension_numbers = #tpu.dot_dimension_numbers<[1], [0], [0], [1], [0, 0, 1, 1], [], []>} : vector<8x32xbf16>, vector<32x128xbf16>, vector<8x128xf32> -> vector<8x128xf32>
    %306 = arith.truncf %303 : vector<8x32xf32> to vector<8x32xbf16>
    %cst_63 = arith.constant dense<0.000000e+00> : vector<8x128xf32>
    %307 = tpu.matmul %306, %166, %cst_63 {dimension_numbers = #tpu.dot_dimension_numbers<[1], [0], [0], [1], [0, 0, 1, 1], [], []>} : vector<8x32xbf16>, vector<32x128xbf16>, vector<8x128xf32> -> vector<8x128xf32>
    %308 = arith.addf %305, %307 : vector<8x128xf32>
    %309 = vector.broadcast %167 : vector<1x128xf32> to vector<8x128xf32>
    %310 = arith.addf %308, %309 : vector<8x128xf32>
    %311 = arith.negf %310 : vector<8x128xf32>
    %312 = math.exp %311 : vector<8x128xf32>
    %cst_64 = arith.constant 1.000000e+00 : f32
    %313 = vector.broadcast %cst_64 : f32 to vector<8x128xf32>
    %314 = arith.addf %313, %312 : vector<8x128xf32>
    %315 = arith.divf %313, %314 : vector<8x128xf32>
    %316 = vector.extract_strided_slice %315 {offsets = [0, 0], sizes = [8, 32], strides = [1, 1]} : vector<8x128xf32> to vector<8x32xf32>
    %317 = vector.extract_strided_slice %315 {offsets = [0, 32], sizes = [8, 32], strides = [1, 1]} : vector<8x128xf32> to vector<8x32xf32>
    %318 = vector.extract_strided_slice %315 {offsets = [0, 96], sizes = [8, 32], strides = [1, 1]} : vector<8x128xf32> to vector<8x32xf32>
    %319 = vector.extract_strided_slice %310 {offsets = [0, 64], sizes = [8, 32], strides = [1, 1]} : vector<8x128xf32> to vector<8x32xf32>
    %320 = math.tanh %319 : vector<8x32xf32>
    %321 = arith.mulf %317, %301 : vector<8x32xf32>
    %322 = arith.mulf %316, %320 : vector<8x32xf32>
    %323 = arith.addf %321, %322 : vector<8x32xf32>
    %324 = math.tanh %323 : vector<8x32xf32>
    %325 = arith.mulf %318, %324 : vector<8x32xf32>
    %326 = arith.truncf %164 : vector<8x32xf32> to vector<8x32xbf16>
    %cst_65 = arith.constant dense<0.000000e+00> : vector<8x128xf32>
    %327 = tpu.matmul %326, %165, %cst_65 {dimension_numbers = #tpu.dot_dimension_numbers<[1], [0], [0], [1], [0, 0, 1, 1], [], []>} : vector<8x32xbf16>, vector<32x128xbf16>, vector<8x128xf32> -> vector<8x128xf32>
    %328 = arith.truncf %325 : vector<8x32xf32> to vector<8x32xbf16>
    %cst_66 = arith.constant dense<0.000000e+00> : vector<8x128xf32>
    %329 = tpu.matmul %328, %166, %cst_66 {dimension_numbers = #tpu.dot_dimension_numbers<[1], [0], [0], [1], [0, 0, 1, 1], [], []>} : vector<8x32xbf16>, vector<32x128xbf16>, vector<8x128xf32> -> vector<8x128xf32>
    %330 = arith.addf %327, %329 : vector<8x128xf32>
    %331 = vector.broadcast %167 : vector<1x128xf32> to vector<8x128xf32>
    %332 = arith.addf %330, %331 : vector<8x128xf32>
    %333 = arith.negf %332 : vector<8x128xf32>
    %334 = math.exp %333 : vector<8x128xf32>
    %cst_67 = arith.constant 1.000000e+00 : f32
    %335 = vector.broadcast %cst_67 : f32 to vector<8x128xf32>
    %336 = arith.addf %335, %334 : vector<8x128xf32>
    %337 = arith.divf %335, %336 : vector<8x128xf32>
    %338 = vector.extract_strided_slice %337 {offsets = [0, 0], sizes = [8, 32], strides = [1, 1]} : vector<8x128xf32> to vector<8x32xf32>
    %339 = vector.extract_strided_slice %337 {offsets = [0, 32], sizes = [8, 32], strides = [1, 1]} : vector<8x128xf32> to vector<8x32xf32>
    %340 = vector.extract_strided_slice %337 {offsets = [0, 96], sizes = [8, 32], strides = [1, 1]} : vector<8x128xf32> to vector<8x32xf32>
    %341 = vector.extract_strided_slice %332 {offsets = [0, 64], sizes = [8, 32], strides = [1, 1]} : vector<8x128xf32> to vector<8x32xf32>
    %342 = math.tanh %341 : vector<8x32xf32>
    %343 = arith.mulf %339, %323 : vector<8x32xf32>
    %344 = arith.mulf %338, %342 : vector<8x32xf32>
    %345 = arith.addf %343, %344 : vector<8x32xf32>
    %346 = math.tanh %345 : vector<8x32xf32>
    %347 = arith.mulf %340, %346 : vector<8x32xf32>
    %cst_68 = arith.constant dense<0.000000e+00> : vector<8x26xf32>
    %348 = tpu.matmul %347, %1, %cst_68 {dimension_numbers = #tpu.dot_dimension_numbers<[1], [0], [0], [1], [0, 0, 1, 1], [], []>} : vector<8x32xf32>, vector<32x26xf32>, vector<8x26xf32> -> vector<8x26xf32>
    %349 = vector.broadcast %0 : vector<1x26xf32> to vector<8x26xf32>
    %350 = arith.addf %348, %349 : vector<8x26xf32>
    %c0_69 = arith.constant 0 : index
    %c0_70 = arith.constant 0 : index
    %351 = vector.load %arg11[%c0_69, %c0_70] : memref<8x26xf32, #tpu.memory_space<vmem>>, vector<8x26xf32>
    tpu.vector_store %arg11[%c0_69, %c0_70], %350 {strides = array<i32>} : memref<8x26xf32, #tpu.memory_space<vmem>>, vector<8x26xf32>,
    return
  }
}

</mosaic_0001>

<llo_original>
// kernel: tpu_custom_call.1
$region0: #{tpu_custom_call.1}
  #allocation0 [shape = 'u32[]', space=smem, size = 0x4, offset = 0x4, fixed_abs, tag = 'smem constant byte address 0x4 - core index']
  #allocation1 [shape = 'u32[144,128]{1,0:T(1,128)}', space=vmem, size = 0x12000, scoped, tag = 'internal scratch']
  %s0 = inlined_call_operand.vmem [shape: bf16[64,4], index: 0, kind: input, shape index: {}]
  %s1 = inlined_call_operand.vmem [shape: f32[2,8,32], index: 1, kind: input, shape index: {}]
  %s2 = inlined_call_operand.hbm [shape: f32[2,8,32], index: 2, kind: input, shape index: {}]
  %s3 = inlined_call_operand.vmem [shape: bf16[4,128], index: 3, kind: input, shape index: {}]
  %s4 = inlined_call_operand.hbm [shape: bf16[32,128], index: 4, kind: input, shape index: {}]
  %s5 = inlined_call_operand.hbm [shape: f32[1,128], index: 5, kind: input, shape index: {}]
  %s6 = inlined_call_operand.hbm [shape: bf16[32,128], index: 6, kind: input, shape index: {}]
  %s7 = inlined_call_operand.hbm [shape: bf16[32,128], index: 7, kind: input, shape index: {}]
  %s8 = inlined_call_operand.hbm [shape: f32[1,128], index: 8, kind: input, shape index: {}]
  %s9 = inlined_call_operand.vmem [shape: f32[32,26], index: 9, kind: input, shape index: {}]
  %s10 = inlined_call_operand.vmem [shape: f32[1,26], index: 10, kind: input, shape index: {}]
  %s11 = inlined_call_operand.hbm [shape: f32[8,26], index: 11, kind: output, shape index: {}]
  %s12 = sld [smem:[#allocation0]]
  $region78: #{tpu_custom_call.1} parent=0
    _
  %s14 = ssub.s32 1, %s12
  %s15 = scalar_select 0, %s14, %s12
  $region1: #{tpu_custom_call.1} parent=0
    #allocation2 [shape = 'u8[8192]{0}', space=vmem, size = 0x2000, scoped, tag = 'input window, operand 2, single buffered']
    #allocation3 [shape = 's32[1]{0}', space=sflag, size = 0x4, scoped, tag = 'scoped memory for tpu_custom_call.1']
    #allocation4 [shape = 's32[1]{0}', space=sflag, size = 0x4, scoped, tag = 'scoped memory for tpu_custom_call.1']
    #allocation5 [shape = 'u8[8192]{0}', space=vmem, size = 0x2000, scoped, tag = 'input window, operand 4, single buffered']
    #allocation6 [shape = 's32[1]{0}', space=sflag, size = 0x4, scoped, tag = 'scoped memory for tpu_custom_call.1']
    #allocation7 [shape = 'u8[512]{0}', space=vmem, size = 0x400, scoped, tag = 'input window, operand 5, single buffered']
    #allocation8 [shape = 'u8[8192]{0}', space=vmem, size = 0x2000, scoped, tag = 'input window, operand 6, single buffered']
    #allocation9 [shape = 's32[1]{0}', space=sflag, size = 0x4, scoped, tag = 'scoped memory for tpu_custom_call.1']
    #allocation10 [shape = 'u8[8192]{0}', space=vmem, size = 0x2000, scoped, tag = 'input window, operand 7, single buffered']
    #allocation11 [shape = 'u8[512]{0}', space=vmem, size = 0x400, scoped, tag = 'input window, operand 8, single buffered']
    #allocation12 [shape = 's32[1]{0}', space=sflag, size = 0x4, scoped, tag = 'scoped memory for tpu_custom_call.1']
    #allocation13 [shape = 'u8[4096]{0}', space=vmem, size = 0x1000, scoped, tag = 'output window, operand 0, single buffered']
    %16 = vsyncpa [#allocation3], 0
    %17 = vsyncpa [#allocation6], 0
    %18 = vsyncpa [#allocation9], 0
    %19 = vsyncpa [#allocation12], 0
    %20 = vsyncpa [#allocation4], 0
    // Predicated region
    $region2: #{tpu_custom_call.1} parent=1 // pred_check
      _
    $region3: #{tpu_custom_call.1} parent=1 // pred_check_branch
      %22 = sbr.rel (0) target = $region5
    $region4: #{tpu_custom_call.1} parent=1 // pred_region
      _
    $region5: #{tpu_custom_call.1} parent=1 // pred_fallthru
      _
    // Predicated region
    $region6: #{tpu_custom_call.1} parent=1 // pred_check
      _
    $region7: #{tpu_custom_call.1} parent=1 // pred_check_branch
      %24 = sbr.rel (0) target = $region9
    $region8: #{tpu_custom_call.1} parent=1 // pred_region
      _
    $region9: #{tpu_custom_call.1} parent=1 // pred_fallthru
      _
    // Predicated region
    $region10: #{tpu_custom_call.1} parent=1 // pred_check
      _
    $region11: #{tpu_custom_call.1} parent=1 // pred_check_branch
      %26 = sbr.rel (0) target = $region13
    $region12: #{tpu_custom_call.1} parent=1 // pred_region
      %s28 = ssub.s32 256, 256
      %29 = vsyncadd [#allocation3], %s28
      %s30 = sshll.u32 [#allocation2], 4
      %s31 = int_to_ptr.vmem [resolvable:$true] %s30
      %36 = dma.hbm_to_vmem [thread:$0]  %s2, 256, %s31, [#allocation3], 128, 128, 8
    $region13: #{tpu_custom_call.1} parent=1 // pred_fallthru
      _
    // Predicated region
    $region14: #{tpu_custom_call.1} parent=1 // pred_check
      _
    $region15: #{tpu_custom_call.1} parent=1 // pred_check_branch
      %38 = sbr.rel (0) target = $region17
    $region16: #{tpu_custom_call.1} parent=1 // pred_region
      _
    $region17: #{tpu_custom_call.1} parent=1 // pred_fallthru
      _
    // Predicated region
    $region18: #{tpu_custom_call.1} parent=1 // pred_check
      _
    $region19: #{tpu_custom_call.1} parent=1 // pred_check_branch
      %40 = sbr.rel (0) target = $region21
    $region20: #{tpu_custom_call.1} parent=1 // pred_region
      %s42 = ssub.s32 256, 256
      %43 = vsyncadd [#allocation6], %s42
      %s44 = sshll.u32 [#allocation5], 4
      %s45 = int_to_ptr.vmem [resolvable:$true] %s44
      %50 = dma.hbm_to_vmem [thread:$0]  %s4, 256, %s45, [#allocation6], 64, 64, 4
    $region21: #{tpu_custom_call.1} parent=1 // pred_fallthru
      _
    // Predicated region
    $region22: #{tpu_custom_call.1} parent=1 // pred_check
      _
    $region23: #{tpu_custom_call.1} parent=1 // pred_check_branch
      %52 = sbr.rel (0) target = $region25
    $region24: #{tpu_custom_call.1} parent=1 // pred_region
      %s54 = ssub.s32 16, 16
      %55 = vsyncadd [#allocation6], %s54
      %s57 = sshll.u32 [#allocation7], 4
      %s58 = int_to_ptr.vmem [resolvable:$true] %s57
      %60 = dma.hbm_to_vmem [thread:$0]  %s5, 16, %s58, [#allocation6]
    $region25: #{tpu_custom_call.1} parent=1 // pred_fallthru
      _
    // Predicated region
    $region26: #{tpu_custom_call.1} parent=1 // pred_check
      _
    $region27: #{tpu_custom_call.1} parent=1 // pred_check_branch
      %62 = sbr.rel (0) target = $region29
    $region28: #{tpu_custom_call.1} parent=1 // pred_region
      %s64 = ssub.s32 256, 256
      %65 = vsyncadd [#allocation9], %s64
      %s66 = sshll.u32 [#allocation8], 4
      %s67 = int_to_ptr.vmem [resolvable:$true] %s66
      %72 = dma.hbm_to_vmem [thread:$0]  %s6, 256, %s67, [#allocation9], 64, 64, 4
    $region29: #{tpu_custom_call.1} parent=1 // pred_fallthru
      _
    // Predicated region
    $region30: #{tpu_custom_call.1} parent=1 // pred_check
      _
    $region31: #{tpu_custom_call.1} parent=1 // pred_check_branch
      %74 = sbr.rel (0) target = $region33
    $region32: #{tpu_custom_call.1} parent=1 // pred_region
      %s76 = ssub.s32 256, 256
      %77 = vsyncadd [#allocation9], %s76
      %s78 = sshll.u32 [#allocation10], 4
      %s79 = int_to_ptr.vmem [resolvable:$true] %s78
      %84 = dma.hbm_to_vmem [thread:$0]  %s7, 256, %s79, [#allocation9], 64, 64, 4
    $region33: #{tpu_custom_call.1} parent=1 // pred_fallthru
      _
    // Predicated region
    $region34: #{tpu_custom_call.1} parent=1 // pred_check
      _
    $region35: #{tpu_custom_call.1} parent=1 // pred_check_branch
      %86 = sbr.rel (0) target = $region37
    $region36: #{tpu_custom_call.1} parent=1 // pred_region
      %s88 = ssub.s32 16, 16
      %89 = vsyncadd [#allocation12], %s88
      %s91 = sshll.u32 [#allocation11], 4
      %s92 = int_to_ptr.vmem [resolvable:$true] %s91
      %94 = dma.hbm_to_vmem [thread:$0]  %s8, 16, %s92, [#allocation12]
    $region37: #{tpu_custom_call.1} parent=1 // pred_fallthru
      _
    // Predicated region
    $region38: #{tpu_custom_call.1} parent=1 // pred_check
      _
    $region39: #{tpu_custom_call.1} parent=1 // pred_check_branch
      %96 = sbr.rel (0) target = $region41
    $region40: #{tpu_custom_call.1} parent=1 // pred_region
      _
    $region41: #{tpu_custom_call.1} parent=1 // pred_fallthru
      _
    // Predicated region
    $region42: #{tpu_custom_call.1} parent=1 // pred_check
      _
    $region43: #{tpu_custom_call.1} parent=1 // pred_check_branch
      %98 = sbr.rel (0) target = $region45
    $region44: #{tpu_custom_call.1} parent=1 // pred_region
      _
    $region45: #{tpu_custom_call.1} parent=1 // pred_fallthru
      _
    // Predicated region
    $region46: #{tpu_custom_call.1} parent=1 // pred_check
      _
    $region47: #{tpu_custom_call.1} parent=1 // pred_check_branch
      %100 = sbr.rel (0) target = $region49
    $region48: #{tpu_custom_call.1} parent=1 // pred_region
      %101 = dma.done [#allocation3], 256
    $region49: #{tpu_custom_call.1} parent=1 // pred_fallthru
      _
    // Predicated region
    $region50: #{tpu_custom_call.1} parent=1 // pred_check
      _
    $region51: #{tpu_custom_call.1} parent=1 // pred_check_branch
      %103 = sbr.rel (0) target = $region53
    $region52: #{tpu_custom_call.1} parent=1 // pred_region
      %104 = dma.done [#allocation6], 256
    $region53: #{tpu_custom_call.1} parent=1 // pred_fallthru
      _
    // Predicated region
    $region54: #{tpu_custom_call.1} parent=1 // pred_check
      _
    $region55: #{tpu_custom_call.1} parent=1 // pred_check_branch
      %106 = sbr.rel (0) target = $region57
    $region56: #{tpu_custom_call.1} parent=1 // pred_region
      %107 = dma.done [#allocation6], 16
    $region57: #{tpu_custom_call.1} parent=1 // pred_fallthru
      _
    // Predicated region
    $region58: #{tpu_custom_call.1} parent=1 // pred_check
      _
    $region59: #{tpu_custom_call.1} parent=1 // pred_check_branch
      %109 = sbr.rel (0) target = $region61
    $region60: #{tpu_custom_call.1} parent=1 // pred_region
      %110 = dma.done [#allocation9], 256
    $region61: #{tpu_custom_call.1} parent=1 // pred_fallthru
      _
    // Predicated region
    $region62: #{tpu_custom_call.1} parent=1 // pred_check
      _
    $region63: #{tpu_custom_call.1} parent=1 // pred_check_branch
      %112 = sbr.rel (0) target = $region65
    $region64: #{tpu_custom_call.1} parent=1 // pred_region
      %113 = dma.done [#allocation9], 256
    $region65: #{tpu_custom_call.1} parent=1 // pred_fallthru
      _
    // Predicated region
    $region66: #{tpu_custom_call.1} parent=1 // pred_check
      _
    $region67: #{tpu_custom_call.1} parent=1 // pred_check_branch
      %115 = sbr.rel (0) target = $region69
    $region68: #{tpu_custom_call.1} parent=1 // pred_region
      %116 = dma.done [#allocation12], 16
    $region69: #{tpu_custom_call.1} parent=1 // pred_fallthru
      _
    %v118 = vld [vmem:[%s10] sm:$0x1]
    %v119 = vld [vmem:[%s9] sm:$0xff]
    %v120 = vld [vmem:[%s9 + $0x8] sm:$0xff]
    %v121 = vld [vmem:[%s9 + $0x10] sm:$0xff]
    %v122 = vld [vmem:[%s9 + $0x18] sm:$0xff]
    %v123 = vld [vmem:[%s3] sm:$0x3]
    %v124 = vld [vmem:[#allocation5] sm:$0xf]
    %v125 = vld [vmem:[#allocation5 + $0x4] sm:$0xf]
    %v126 = vld [vmem:[#allocation5 + $0x8] sm:$0xf]
    %v127 = vld [vmem:[#allocation5 + $0xc] sm:$0xf]
    %v128 = vld [vmem:[#allocation7] sm:$0x1]
    %v129 = vld [vmem:[%s0] sm:$0xf]
    %v130 = vld [vmem:[%s0 + $0x4] sm:$0xf]
    %v131 = vld [vmem:[%s0 + $0x8] sm:$0xf]
    %v132 = vld [vmem:[%s0 + $0xc] sm:$0xf]
    %v133 = vld [vmem:[%s0 + $0x10] sm:$0xf]
    %v134 = vld [vmem:[%s0 + $0x14] sm:$0xf]
    %v135 = vld [vmem:[%s0 + $0x18] sm:$0xf]
    %v136 = vld [vmem:[%s0 + $0x1c] sm:$0xf]
    %v138 = vlaneseq
    %v139 = vshrl.u32 %v138, 7
    %v140 = vsub.s32 0, %v139
    %v141 = vrot.slane %v128, %v140
    %v151 = vunpack.c.l.b16 %v129
    %v152 = vunpack.c.l.b16 %v130
    %v153 = vunpack.c.l.b16 %v131
    %v154 = vunpack.c.l.b16 %v132
    %v155 = vunpack.c.l.b16 %v133
    %v156 = vunpack.c.l.b16 %v134
    %v157 = vunpack.c.l.b16 %v135
    %v158 = vunpack.c.l.b16 %v136
    %v159 = vpack.c.b16 %v152, %v151
    %v160 = vpack.c.b16 %v154, %v153
    %v161 = vpack.c.b16 %v156, %v155
    %v162 = vpack.c.b16 %v158, %v157
    %vm163 = vcmask 31744
    %v165 = vsel %vm163, %v159, 0
    %v168 = vsel %vm163, %v160, 0
    %v171 = vsel %vm163, %v161, 0
    %v174 = vsel %vm163, %v162, 0
    %vm176 = vcmask 1041408
    %v178 = vsel %vm176, %v123, 0
    %180 = vmatprep.subr.bf16.mxu0 0
    %181 = vmatpush1.bf16.msra.mxu0 0
    %182 = vmatprep.subr.bf16.mxu0 0
    %183 = vmatpush1.bf16.msra.mxu0 0
    %184 = vmatprep.subr.bf16.mxu0 0
    %185 = vmatpush1.bf16.msra.mxu0 0
    %186 = vmatprep.subr.bf16.mxu0 0
    %187 = vmatpush1.bf16.msra.mxu0 0
    %188 = vmatprep.subr.bf16.mxu0 0
    %189 = vmatpush1.bf16.msra.mxu0 0
    %190 = vmatprep.subr.bf16.mxu0 0
    %191 = vmatpush1.bf16.msra.mxu0 0
    %192 = vmatprep.subr.bf16.mxu0 0
    %193 = vmatpush1.bf16.msra.mxu0 0
    %194 = vmatprep.subr.bf16.mxu0 0
    %195 = vmatpush1.bf16.msra.mxu0 %v178
    %196 = vmatprep.subr.bf16.mxu0 0
    %197 = vmatpush2.bf16.msra.mxu0 0
    %198 = vmatprep.subr.bf16.mxu0 0
    %199 = vmatpush2.bf16.msra.mxu0 0
    %200 = vmatprep.subr.bf16.mxu0 0
    %201 = vmatpush2.bf16.msra.mxu0 0
    %202 = vmatprep.subr.bf16.mxu0 0
    %203 = vmatpush2.bf16.msra.mxu0 0
    %204 = vmatprep.subr.bf16.mxu0 0
    %205 = vmatpush2.bf16.msra.mxu0 0
    %206 = vmatprep.subr.bf16.mxu0 0
    %207 = vmatpush2.bf16.msra.mxu0 0
    %208 = vmatprep.subr.bf16.mxu0 0
    %209 = vmatpush2.bf16.msra.mxu0 0
    %210 = vmatprep.subr.bf16.mxu0 0
    %211 = vmatpush2.bf16.msra.mxu0 0
    %212 = vmatprep.mubr.bf16.mxu0 0
    %213 = vmatmul.mubr.bf16.gmra.mxu0 %v165
    %v214 = vpop.f32.mrf.mxu0
    %v215 = vadd.f32 %v141, %v214
    %v216 = vpop.f32.mrf.mxu0
    %v217 = vpop.f32.mrf.mxu0
    %v218 = vadd.f32 %v141, %v217
    %v219 = vpop.f32.mrf.mxu0
    %220 = vmatprep.mubr.bf16.mxu0 0
    %221 = vmatmul.mubr.bf16.gmra.mxu0 %v168
    %v222 = vpop.f32.mrf.mxu0
    %v223 = vadd.f32 %v141, %v222
    %v224 = vpop.f32.mrf.mxu0
    %v225 = vpop.f32.mrf.mxu0
    %v226 = vadd.f32 %v141, %v225
    %v227 = vpop.f32.mrf.mxu0
    %228 = vmatprep.mubr.bf16.mxu0 0
    %229 = vmatmul.mubr.bf16.gmra.mxu0 %v171
    %v230 = vpop.f32.mrf.mxu0
    %v231 = vadd.f32 %v141, %v230
    %v232 = vpop.f32.mrf.mxu0
    %v233 = vpop.f32.mrf.mxu0
    %v234 = vadd.f32 %v141, %v233
    %v235 = vpop.f32.mrf.mxu0
    %236 = vmatprep.mubr.bf16.mxu0 0
    %237 = vmatmul.mubr.bf16.gmra.mxu0 %v174
    %v238 = vpop.f32.mrf.mxu0
    %v239 = vadd.f32 %v141, %v238
    %v240 = vpop.f32.mrf.mxu0
    %v241 = vpop.f32.mrf.mxu0
    %v242 = vadd.f32 %v141, %v241
    %v243 = vpop.f32.mrf.mxu0
    %244 = vdwg.mxu0
    %v245 = vld [vmem:[%s1] sm:$0xff]
    %v246 = vld [vmem:[#allocation2] sm:$0xff]
    %v247 = vpack.c.bf16 %v245, %v245
    %v252 = vunpack.c.l.b16 %v124
    %v253 = vunpack.c.l.b16 %v125
    %v254 = vunpack.c.l.b16 %v126
    %v255 = vunpack.c.l.b16 %v127
    %v256 = vpack.c.b16 %v253, %v252
    %v257 = vpack.c.b16 %v255, %v254
    %vm260 = vcmask 261120
    %v262 = vsel %vm260, %v247, 0
    %264 = vmatprep.subr.bf16.mxu0 0
    %265 = vmatpush1.bf16.msra.mxu0 0
    %266 = vmatprep.subr.bf16.mxu0 0
    %267 = vmatpush1.bf16.msra.mxu0 0
    %268 = vmatprep.subr.bf16.mxu0 0
    %269 = vmatpush1.bf16.msra.mxu0 0
    %270 = vmatprep.subr.bf16.mxu0 0
    %271 = vmatpush1.bf16.msra.mxu0 0
    %272 = vmatprep.subr.bf16.mxu0 0
    %273 = vmatpush1.bf16.msra.mxu0 0
    %274 = vmatprep.subr.bf16.mxu0 0
    %275 = vmatpush1.bf16.msra.mxu0 0
    %276 = vmatprep.subr.bf16.mxu0 0
    %277 = vmatpush1.bf16.msra.mxu0 %v257
    %278 = vmatprep.subr.bf16.mxu0 0
    %279 = vmatpush1.bf16.msra.mxu0 %v256
    %280 = vmatprep.subr.bf16.mxu0 0
    %281 = vmatpush2.bf16.msra.mxu0 0
    %282 = vmatprep.subr.bf16.mxu0 0
    %283 = vmatpush2.bf16.msra.mxu0 0
    %284 = vmatprep.subr.bf16.mxu0 0
    %285 = vmatpush2.bf16.msra.mxu0 0
    %286 = vmatprep.subr.bf16.mxu0 0
    %287 = vmatpush2.bf16.msra.mxu0 0
    %288 = vmatprep.subr.bf16.mxu0 0
    %289 = vmatpush2.bf16.msra.mxu0 0
    %290 = vmatprep.subr.bf16.mxu0 0
    %291 = vmatpush2.bf16.msra.mxu0 0
    %292 = vmatprep.subr.bf16.mxu0 0
    %293 = vmatpush2.bf16.msra.mxu0 0
    %294 = vmatprep.subr.bf16.mxu0 0
    %295 = vmatpush2.bf16.msra.mxu0 0
    %296 = vmatprep.mubr.bf16.mxu0 0
    %297 = vmatmul.mubr.bf16.gmra.mxu0 %v262
    %v298 = vpop.f32.mrf.mxu0
    %v299 = vadd.f32 0.0, %v298
    %v300 = vpop.f32.mrf.mxu0
    %v301 = vpop.f32.mrf.mxu0
    %v302 = vpop.f32.mrf.mxu0
    %303 = vdwg.mxu0
    %v304 = vadd.f32 %v215, %v299
    %v305 = vxor.u32 %v304, 2147483648
    %v306 = vmul.f32 %v305, 1.442695
    %v307 = vpow.pop %v306
    %v308 = vadd.f32 %v307, 1.0
    %v309 = vrcp.pop %v308
    %v310 = vmul.f32 1.0, %v309
    %v311 = vtanh.pop %v304
    %313 = vrot.lane.b32.xlu0 %v246, 32
    %v314 = vpop.permute.xlu0 %313
    %v316 = vmul.f32 %v310, %v314
    %318 = vrot.lane.b32.xlu0 %v311, 64
    %v319 = vpop.permute.xlu0 %318
    %v321 = vmul.f32 %v310, %v319
    %323 = vrot.lane.b32.xlu0 %v321, 32
    %v324 = vpop.permute.xlu0 %323
    %v326 = vadd.f32 %v316, %v324
    %v327 = vtanh.pop %v326
    %329 = vrot.lane.b32.xlu0 %v327, 64
    %v330 = vpop.permute.xlu0 %329
    %v332 = vmul.f32 %v310, %v330
    %v333 = vpack.c.bf16 %v332, %v332
    %335 = vrot.lane.b32.xlu0 %v333, 32
    %v336 = vpop.permute.xlu0 %335
    %v338 = vsel %vm260, %v336, 0
    %340 = vmatprep.subr.bf16.mxu0 0
    %341 = vmatpush1.bf16.msra.mxu0 0
    %342 = vmatprep.subr.bf16.mxu0 0
    %343 = vmatpush1.bf16.msra.mxu0 0
    %344 = vmatprep.subr.bf16.mxu0 0
    %345 = vmatpush1.bf16.msra.mxu0 0
    %346 = vmatprep.subr.bf16.mxu0 0
    %347 = vmatpush1.bf16.msra.mxu0 0
    %348 = vmatprep.subr.bf16.mxu0 0
    %349 = vmatpush1.bf16.msra.mxu0 0
    %350 = vmatprep.subr.bf16.mxu0 0
    %351 = vmatpush1.bf16.msra.mxu0 0
    %352 = vmatprep.subr.bf16.mxu0 0
    %353 = vmatpush1.bf16.msra.mxu0 %v257
    %354 = vmatprep.subr.bf16.mxu0 0
    %355 = vmatpush1.bf16.msra.mxu0 %v256
    %356 = vmatprep.subr.bf16.mxu0 0
    %357 = vmatpush2.bf16.msra.mxu0 0
    %358 = vmatprep.subr.bf16.mxu0 0
    %359 = vmatpush2.bf16.msra.mxu0 0
    %360 = vmatprep.subr.bf16.mxu0 0
    %361 = vmatpush2.bf16.msra.mxu0 0
    %362 = vmatprep.subr.bf16.mxu0 0
    %363 = vmatpush2.bf16.msra.mxu0 0
    %364 = vmatprep.subr.bf16.mxu0 0
    %365 = vmatpush2.bf16.msra.mxu0 0
    %366 = vmatprep.subr.bf16.mxu0 0
    %367 = vmatpush2.bf16.msra.mxu0 0
    %368 = vmatprep.subr.bf16.mxu0 0
    %369 = vmatpush2.bf16.msra.mxu0 0
    %370 = vmatprep.subr.bf16.mxu0 0
    %371 = vmatpush2.bf16.msra.mxu0 0
    %372 = vmatprep.mubr.bf16.mxu0 0
    %373 = vmatmul.mubr.bf16.gmra.mxu0 %v338
    %v374 = vpop.f32.mrf.mxu0
    %v375 = vadd.f32 0.0, %v374
    %v376 = vpop.f32.mrf.mxu0
    %v377 = vpop.f32.mrf.mxu0
    %v378 = vpop.f32.mrf.mxu0
    %379 = vdwg.mxu0
    %v380 = vadd.f32 %v218, %v375
    %v381 = vxor.u32 %v380, 2147483648
    %v382 = vmul.f32 %v381, 1.442695
    %v383 = vpow.pop %v382
    %v384 = vadd.f32 %v383, 1.0
    %v385 = vrcp.pop %v384
    %v386 = vmul.f32 1.0, %v385
    %v387 = vtanh.pop %v380
    %v388 = vmul.f32 %v386, %v326
    %390 = vrot.lane.b32.xlu0 %v387, 64
    %v391 = vpop.permute.xlu0 %390
    %v393 = vmul.f32 %v386, %v391
    %395 = vrot.lane.b32.xlu0 %v393, 32
    %v396 = vpop.permute.xlu0 %395
    %v398 = vadd.f32 %v388, %v396
    %v399 = vtanh.pop %v398
    %401 = vrot.lane.b32.xlu0 %v399, 64
    %v402 = vpop.permute.xlu0 %401
    %v404 = vmul.f32 %v386, %v402
    %v405 = vpack.c.bf16 %v404, %v404
    %407 = vrot.lane.b32.xlu0 %v405, 32
    %v408 = vpop.permute.xlu0 %407
    %v410 = vsel %vm260, %v408, 0
    %412 = vmatprep.subr.bf16.mxu0 0
    %413 = vmatpush1.bf16.msra.mxu0 0
    %414 = vmatprep.subr.bf16.mxu0 0
    %415 = vmatpush1.bf16.msra.mxu0 0
    %416 = vmatprep.subr.bf16.mxu0 0
    %417 = vmatpush1.bf16.msra.mxu0 0
    %418 = vmatprep.subr.bf16.mxu0 0
    %419 = vmatpush1.bf16.msra.mxu0 0
    %420 = vmatprep.subr.bf16.mxu0 0
    %421 = vmatpush1.bf16.msra.mxu0 0
    %422 = vmatprep.subr.bf16.mxu0 0
    %423 = vmatpush1.bf16.msra.mxu0 0
    %424 = vmatprep.subr.bf16.mxu0 0
    %425 = vmatpush1.bf16.msra.mxu0 %v257
    %426 = vmatprep.subr.bf16.mxu0 0
    %427 = vmatpush1.bf16.msra.mxu0 %v256
    %428 = vmatprep.subr.bf16.mxu0 0
    %429 = vmatpush2.bf16.msra.mxu0 0
    %430 = vmatprep.subr.bf16.mxu0 0
    %431 = vmatpush2.bf16.msra.mxu0 0
    %432 = vmatprep.subr.bf16.mxu0 0
    %433 = vmatpush2.bf16.msra.mxu0 0
    %434 = vmatprep.subr.bf16.mxu0 0
    %435 = vmatpush2.bf16.msra.mxu0 0
    %436 = vmatprep.subr.bf16.mxu0 0
    %437 = vmatpush2.bf16.msra.mxu0 0
    %438 = vmatprep.subr.bf16.mxu0 0
    %439 = vmatpush2.bf16.msra.mxu0 0
    %440 = vmatprep.subr.bf16.mxu0 0
    %441 = vmatpush2.bf16.msra.mxu0 0
    %442 = vmatprep.subr.bf16.mxu0 0
    %443 = vmatpush2.bf16.msra.mxu0 0
    %444 = vmatprep.mubr.bf16.mxu0 0
    %445 = vmatmul.mubr.bf16.gmra.mxu0 %v410
    %v446 = vpop.f32.mrf.mxu0
    %v447 = vadd.f32 0.0, %v446
    %v448 = vpop.f32.mrf.mxu0
    %v449 = vpop.f32.mrf.mxu0
    %v450 = vpop.f32.mrf.mxu0
    %451 = vdwg.mxu0
    %v452 = vadd.f32 %v223, %v447
    %v453 = vxor.u32 %v452, 2147483648
    %v454 = vmul.f32 %v453, 1.442695
    %v455 = vpow.pop %v454
    %v456 = vadd.f32 %v455, 1.0
    %v457 = vrcp.pop %v456
    %v458 = vmul.f32 1.0, %v457
    %v459 = vtanh.pop %v452
    %v460 = vmul.f32 %v458, %v398
    %462 = vrot.lane.b32.xlu0 %v459, 64
    %v463 = vpop.permute.xlu0 %462
    %v465 = vmul.f32 %v458, %v463
    %467 = vrot.lane.b32.xlu0 %v465, 32
    %v468 = vpop.permute.xlu0 %467
    %v470 = vadd.f32 %v460, %v468
    %v471 = vtanh.pop %v470
    %473 = vrot.lane.b32.xlu0 %v471, 64
    %v474 = vpop.permute.xlu0 %473
    %v476 = vmul.f32 %v458, %v474
    %v477 = vpack.c.bf16 %v476, %v476
    %479 = vrot.lane.b32.xlu0 %v477, 32
    %v480 = vpop.permute.xlu0 %479
    %v482 = vsel %vm260, %v480, 0
    %484 = vmatprep.subr.bf16.mxu0 0
    %485 = vmatpush1.bf16.msra.mxu0 0
    %486 = vmatprep.subr.bf16.mxu0 0
    %487 = vmatpush1.bf16.msra.mxu0 0
    %488 = vmatprep.subr.bf16.mxu0 0
    %489 = vmatpush1.bf16.msra.mxu0 0
    %490 = vmatprep.subr.bf16.mxu0 0
    %491 = vmatpush1.bf16.msra.mxu0 0
    %492 = vmatprep.subr.bf16.mxu0 0
    %493 = vmatpush1.bf16.msra.mxu0 0
    %494 = vmatprep.subr.bf16.mxu0 0
    %495 = vmatpush1.bf16.msra.mxu0 0
    %496 = vmatprep.subr.bf16.mxu0 0
    %497 = vmatpush1.bf16.msra.mxu0 %v257
    %498 = vmatprep.subr.bf16.mxu0 0
    %499 = vmatpush1.bf16.msra.mxu0 %v256
    %500 = vmatprep.subr.bf16.mxu0 0
    %501 = vmatpush2.bf16.msra.mxu0 0
    %502 = vmatprep.subr.bf16.mxu0 0
    %503 = vmatpush2.bf16.msra.mxu0 0
    %504 = vmatprep.subr.bf16.mxu0 0
    %505 = vmatpush2.bf16.msra.mxu0 0
    %506 = vmatprep.subr.bf16.mxu0 0
    %507 = vmatpush2.bf16.msra.mxu0 0
    %508 = vmatprep.subr.bf16.mxu0 0
    %509 = vmatpush2.bf16.msra.mxu0 0
    %510 = vmatprep.subr.bf16.mxu0 0
    %511 = vmatpush2.bf16.msra.mxu0 0
    %512 = vmatprep.subr.bf16.mxu0 0
    %513 = vmatpush2.bf16.msra.mxu0 0
    %514 = vmatprep.subr.bf16.mxu0 0
    %515 = vmatpush2.bf16.msra.mxu0 0
    %516 = vmatprep.mubr.bf16.mxu0 0
    %517 = vmatmul.mubr.bf16.gmra.mxu0 %v482
    %v518 = vpop.f32.mrf.mxu0
    %v519 = vadd.f32 0.0, %v518
    %v520 = vpop.f32.mrf.mxu0
    %v521 = vpop.f32.mrf.mxu0
    %v522 = vpop.f32.mrf.mxu0
    %523 = vdwg.mxu0
    %v524 = vadd.f32 %v226, %v519
    %v525 = vxor.u32 %v524, 2147483648
    %v526 = vmul.f32 %v525, 1.442695
    %v527 = vpow.pop %v526
    %v528 = vadd.f32 %v527, 1.0
    %v529 = vrcp.pop %v528
    %v530 = vmul.f32 1.0, %v529
    %v531 = vtanh.pop %v524
    %v532 = vmul.f32 %v530, %v470
    %534 = vrot.lane.b32.xlu0 %v531, 64
    %v535 = vpop.permute.xlu0 %534
    %v537 = vmul.f32 %v530, %v535
    %539 = vrot.lane.b32.xlu0 %v537, 32
    %v540 = vpop.permute.xlu0 %539
    %v542 = vadd.f32 %v532, %v540
    %v543 = vtanh.pop %v542
    %545 = vrot.lane.b32.xlu0 %v543, 64
    %v546 = vpop.permute.xlu0 %545
    %v548 = vmul.f32 %v530, %v546
    %v549 = vpack.c.bf16 %v548, %v548
    %551 = vrot.lane.b32.xlu0 %v549, 32
    %v552 = vpop.permute.xlu0 %551
    %v554 = vsel %vm260, %v552, 0
    %556 = vmatprep.subr.bf16.mxu0 0
    %557 = vmatpush1.bf16.msra.mxu0 0
    %558 = vmatprep.subr.bf16.mxu0 0
    %559 = vmatpush1.bf16.msra.mxu0 0
    %560 = vmatprep.subr.bf16.mxu0 0
    %561 = vmatpush1.bf16.msra.mxu0 0
    %562 = vmatprep.subr.bf16.mxu0 0
    %563 = vmatpush1.bf16.msra.mxu0 0
    %564 = vmatprep.subr.bf16.mxu0 0
    %565 = vmatpush1.bf16.msra.mxu0 0
    %566 = vmatprep.subr.bf16.mxu0 0
    %567 = vmatpush1.bf16.msra.mxu0 0
    %568 = vmatprep.subr.bf16.mxu0 0
    %569 = vmatpush1.bf16.msra.mxu0 %v257
    %570 = vmatprep.subr.bf16.mxu0 0
    %571 = vmatpush1.bf16.msra.mxu0 %v256
    %572 = vmatprep.subr.bf16.mxu0 0
    %573 = vmatpush2.bf16.msra.mxu0 0
    %574 = vmatprep.subr.bf16.mxu0 0
    %575 = vmatpush2.bf16.msra.mxu0 0
    %576 = vmatprep.subr.bf16.mxu0 0
    %577 = vmatpush2.bf16.msra.mxu0 0
    %578 = vmatprep.subr.bf16.mxu0 0
    %579 = vmatpush2.bf16.msra.mxu0 0
    %580 = vmatprep.subr.bf16.mxu0 0
    %581 = vmatpush2.bf16.msra.mxu0 0
    %582 = vmatprep.subr.bf16.mxu0 0
    %583 = vmatpush2.bf16.msra.mxu0 0
    %584 = vmatprep.subr.bf16.mxu0 0
    %585 = vmatpush2.bf16.msra.mxu0 0
    %586 = vmatprep.subr.bf16.mxu0 0
    %587 = vmatpush2.bf16.msra.mxu0 0
    %588 = vmatprep.mubr.bf16.mxu0 0
    %589 = vmatmul.mubr.bf16.gmra.mxu0 %v554
    %v590 = vpop.f32.mrf.mxu0
    %v591 = vadd.f32 0.0, %v590
    %v592 = vpop.f32.mrf.mxu0
    %v593 = vpop.f32.mrf.mxu0
    %v594 = vpop.f32.mrf.mxu0
    %595 = vdwg.mxu0
    %v596 = vadd.f32 %v231, %v591
    %v597 = vxor.u32 %v596, 2147483648
    %v598 = vmul.f32 %v597, 1.442695
    %v599 = vpow.pop %v598
    %v600 = vadd.f32 %v599, 1.0
    %v601 = vrcp.pop %v600
    %v602 = vmul.f32 1.0, %v601
    %v603 = vtanh.pop %v596
    %v604 = vmul.f32 %v602, %v542
    %606 = vrot.lane.b32.xlu0 %v603, 64
    %v607 = vpop.permute.xlu0 %606
    %v609 = vmul.f32 %v602, %v607
    %611 = vrot.lane.b32.xlu0 %v609, 32
    %v612 = vpop.permute.xlu0 %611
    %v614 = vadd.f32 %v604, %v612
    %v615 = vtanh.pop %v614
    %617 = vrot.lane.b32.xlu0 %v615, 64
    %v618 = vpop.permute.xlu0 %617
    %v620 = vmul.f32 %v602, %v618
    %v621 = vpack.c.bf16 %v620, %v620
    %623 = vrot.lane.b32.xlu0 %v621, 32
    %v624 = vpop.permute.xlu0 %623
    %v626 = vsel %vm260, %v624, 0
    %628 = vmatprep.subr.bf16.mxu0 0
    %629 = vmatpush1.bf16.msra.mxu0 0
    %630 = vmatprep.subr.bf16.mxu0 0
    %631 = vmatpush1.bf16.msra.mxu0 0
    %632 = vmatprep.subr.bf16.mxu0 0
    %633 = vmatpush1.bf16.msra.mxu0 0
    %634 = vmatprep.subr.bf16.mxu0 0
    %635 = vmatpush1.bf16.msra.mxu0 0
    %636 = vmatprep.subr.bf16.mxu0 0
    %637 = vmatpush1.bf16.msra.mxu0 0
    %638 = vmatprep.subr.bf16.mxu0 0
    %639 = vmatpush1.bf16.msra.mxu0 0
    %640 = vmatprep.subr.bf16.mxu0 0
    %641 = vmatpush1.bf16.msra.mxu0 %v257
    %642 = vmatprep.subr.bf16.mxu0 0
    %643 = vmatpush1.bf16.msra.mxu0 %v256
    %644 = vmatprep.subr.bf16.mxu0 0
    %645 = vmatpush2.bf16.msra.mxu0 0
    %646 = vmatprep.subr.bf16.mxu0 0
    %647 = vmatpush2.bf16.msra.mxu0 0
    %648 = vmatprep.subr.bf16.mxu0 0
    %649 = vmatpush2.bf16.msra.mxu0 0
    %650 = vmatprep.subr.bf16.mxu0 0
    %651 = vmatpush2.bf16.msra.mxu0 0
    %652 = vmatprep.subr.bf16.mxu0 0
    %653 = vmatpush2.bf16.msra.mxu0 0
    %654 = vmatprep.subr.bf16.mxu0 0
    %655 = vmatpush2.bf16.msra.mxu0 0
    %656 = vmatprep.subr.bf16.mxu0 0
    %657 = vmatpush2.bf16.msra.mxu0 0
    %658 = vmatprep.subr.bf16.mxu0 0
    %659 = vmatpush2.bf16.msra.mxu0 0
    %660 = vmatprep.mubr.bf16.mxu0 0
    %661 = vmatmul.mubr.bf16.gmra.mxu0 %v626
    %v662 = vpop.f32.mrf.mxu0
    %v663 = vadd.f32 0.0, %v662
    %v664 = vpop.f32.mrf.mxu0
    %v665 = vpop.f32.mrf.mxu0
    %v666 = vpop.f32.mrf.mxu0
    %667 = vdwg.mxu0
    %v668 = vadd.f32 %v234, %v663
    %v669 = vxor.u32 %v668, 2147483648
    %v670 = vmul.f32 %v669, 1.442695
    %v671 = vpow.pop %v670
    %v672 = vadd.f32 %v671, 1.0
    %v673 = vrcp.pop %v672
    %v674 = vmul.f32 1.0, %v673
    %v675 = vtanh.pop %v668
    %v676 = vmul.f32 %v674, %v614
    %678 = vrot.lane.b32.xlu0 %v675, 64
    %v679 = vpop.permute.xlu0 %678
    %v681 = vmul.f32 %v674, %v679
    %683 = vrot.lane.b32.xlu0 %v681, 32
    %v684 = vpop.permute.xlu0 %683
    %v686 = vadd.f32 %v676, %v684
    %v687 = vtanh.pop %v686
    %689 = vrot.lane.b32.xlu0 %v687, 64
    %v690 = vpop.permute.xlu0 %689
    %v692 = vmul.f32 %v674, %v690
    %v693 = vpack.c.bf16 %v692, %v692
    %695 = vrot.lane.b32.xlu0 %v693, 32
    %v696 = vpop.permute.xlu0 %695
    %v698 = vsel %vm260, %v696, 0
    %700 = vmatprep.subr.bf16.mxu0 0
    %701 = vmatpush1.bf16.msra.mxu0 0
    %702 = vmatprep.subr.bf16.mxu0 0
    %703 = vmatpush1.bf16.msra.mxu0 0
    %704 = vmatprep.subr.bf16.mxu0 0
    %705 = vmatpush1.bf16.msra.mxu0 0
    %706 = vmatprep.subr.bf16.mxu0 0
    %707 = vmatpush1.bf16.msra.mxu0 0
    %708 = vmatprep.subr.bf16.mxu0 0
    %709 = vmatpush1.bf16.msra.mxu0 0
    %710 = vmatprep.subr.bf16.mxu0 0
    %711 = vmatpush1.bf16.msra.mxu0 0
    %712 = vmatprep.subr.bf16.mxu0 0
    %713 = vmatpush1.bf16.msra.mxu0 %v257
    %714 = vmatprep.subr.bf16.mxu0 0
    %715 = vmatpush1.bf16.msra.mxu0 %v256
    %716 = vmatprep.subr.bf16.mxu0 0
    %717 = vmatpush2.bf16.msra.mxu0 0
    %718 = vmatprep.subr.bf16.mxu0 0
    %719 = vmatpush2.bf16.msra.mxu0 0
    %720 = vmatprep.subr.bf16.mxu0 0
    %721 = vmatpush2.bf16.msra.mxu0 0
    %722 = vmatprep.subr.bf16.mxu0 0
    %723 = vmatpush2.bf16.msra.mxu0 0
    %724 = vmatprep.subr.bf16.mxu0 0
    %725 = vmatpush2.bf16.msra.mxu0 0
    %726 = vmatprep.subr.bf16.mxu0 0
    %727 = vmatpush2.bf16.msra.mxu0 0
    %728 = vmatprep.subr.bf16.mxu0 0
    %729 = vmatpush2.bf16.msra.mxu0 0
    %730 = vmatprep.subr.bf16.mxu0 0
    %731 = vmatpush2.bf16.msra.mxu0 0
    %732 = vmatprep.mubr.bf16.mxu0 0
    %733 = vmatmul.mubr.bf16.gmra.mxu0 %v698
    %v734 = vpop.f32.mrf.mxu0
    %v735 = vadd.f32 0.0, %v734
    %v736 = vpop.f32.mrf.mxu0
    %v737 = vpop.f32.mrf.mxu0
    %v738 = vpop.f32.mrf.mxu0
    %739 = vdwg.mxu0
    %v740 = vadd.f32 %v239, %v735
    %v741 = vxor.u32 %v740, 2147483648
    %v742 = vmul.f32 %v741, 1.442695
    %v743 = vpow.pop %v742
    %v744 = vadd.f32 %v743, 1.0
    %v745 = vrcp.pop %v744
    %v746 = vmul.f32 1.0, %v745
    %v747 = vtanh.pop %v740
    %v748 = vmul.f32 %v746, %v686
    %750 = vrot.lane.b32.xlu0 %v747, 64
    %v751 = vpop.permute.xlu0 %750
    %v753 = vmul.f32 %v746, %v751
    %755 = vrot.lane.b32.xlu0 %v753, 32
    %v756 = vpop.permute.xlu0 %755
    %v758 = vadd.f32 %v748, %v756
    %v759 = vtanh.pop %v758
    %761 = vrot.lane.b32.xlu0 %v759, 64
    %v762 = vpop.permute.xlu0 %761
    %v764 = vmul.f32 %v746, %v762
    %v765 = vpack.c.bf16 %v764, %v764
    %767 = vrot.lane.b32.xlu0 %v765, 32
    %v768 = vpop.permute.xlu0 %767
    %v770 = vsel %vm260, %v768, 0
    %772 = vmatprep.subr.bf16.mxu0 0
    %773 = vmatpush1.bf16.msra.mxu0 0
    %774 = vmatprep.subr.bf16.mxu0 0
    %775 = vmatpush1.bf16.msra.mxu0 0
    %776 = vmatprep.subr.bf16.mxu0 0
    %777 = vmatpush1.bf16.msra.mxu0 0
    %778 = vmatprep.subr.bf16.mxu0 0
    %779 = vmatpush1.bf16.msra.mxu0 0
    %780 = vmatprep.subr.bf16.mxu0 0
    %781 = vmatpush1.bf16.msra.mxu0 0
    %782 = vmatprep.subr.bf16.mxu0 0
    %783 = vmatpush1.bf16.msra.mxu0 0
    %784 = vmatprep.subr.bf16.mxu0 0
    %785 = vmatpush1.bf16.msra.mxu0 %v257
    %786 = vmatprep.subr.bf16.mxu0 0
    %787 = vmatpush1.bf16.msra.mxu0 %v256
    %788 = vmatprep.subr.bf16.mxu0 0
    %789 = vmatpush2.bf16.msra.mxu0 0
    %790 = vmatprep.subr.bf16.mxu0 0
    %791 = vmatpush2.bf16.msra.mxu0 0
    %792 = vmatprep.subr.bf16.mxu0 0
    %793 = vmatpush2.bf16.msra.mxu0 0
    %794 = vmatprep.subr.bf16.mxu0 0
    %795 = vmatpush2.bf16.msra.mxu0 0
    %796 = vmatprep.subr.bf16.mxu0 0
    %797 = vmatpush2.bf16.msra.mxu0 0
    %798 = vmatprep.subr.bf16.mxu0 0
    %799 = vmatpush2.bf16.msra.mxu0 0
    %800 = vmatprep.subr.bf16.mxu0 0
    %801 = vmatpush2.bf16.msra.mxu0 0
    %802 = vmatprep.subr.bf16.mxu0 0
    %803 = vmatpush2.bf16.msra.mxu0 0
    %804 = vmatprep.mubr.bf16.mxu0 0
    %805 = vmatmul.mubr.bf16.gmra.mxu0 %v770
    %v806 = vpop.f32.mrf.mxu0
    %v807 = vadd.f32 0.0, %v806
    %v808 = vpop.f32.mrf.mxu0
    %v809 = vpop.f32.mrf.mxu0
    %v810 = vpop.f32.mrf.mxu0
    %811 = vdwg.mxu0
    %v812 = vadd.f32 %v242, %v807
    %v813 = vxor.u32 %v812, 2147483648
    %v814 = vmul.f32 %v813, 1.442695
    %v815 = vpow.pop %v814
    %v816 = vadd.f32 %v815, 1.0
    %v817 = vrcp.pop %v816
    %v818 = vmul.f32 1.0, %v817
    %v819 = vtanh.pop %v812
    %v820 = vmul.f32 %v818, %v758
    %822 = vrot.lane.b32.xlu0 %v819, 64
    %v823 = vpop.permute.xlu0 %822
    %v825 = vmul.f32 %v818, %v823
    %827 = vrot.lane.b32.xlu0 %v825, 32
    %v828 = vpop.permute.xlu0 %827
    %v830 = vadd.f32 %v820, %v828
    %v831 = vtanh.pop %v830
    %833 = vrot.lane.b32.xlu0 %v831, 64
    %v834 = vpop.permute.xlu0 %833
    %v836 = vmul.f32 %v818, %v834
    %v837 = vld [vmem:[#allocation8] sm:$0xf]
    %v838 = vld [vmem:[#allocation8 + $0x4] sm:$0xf]
    %v839 = vld [vmem:[#allocation8 + $0x8] sm:$0xf]
    %v840 = vld [vmem:[#allocation8 + $0xc] sm:$0xf]
    %v841 = vld [vmem:[#allocation10] sm:$0xf]
    %v842 = vld [vmem:[#allocation10 + $0x4] sm:$0xf]
    %v843 = vld [vmem:[#allocation10 + $0x8] sm:$0xf]
    %v844 = vld [vmem:[#allocation10 + $0xc] sm:$0xf]
    %v845 = vld [vmem:[#allocation11] sm:$0x1]
    %s846 = scalar_lea.vmem %s1, 8
    %v847 = vld [vmem:[%s846] sm:$0xff]
    %s848 = scalar_lea.vmem [#allocation2], 8
    %v849 = vld [vmem:[%s848] sm:$0xff]
    %v850 = vpack.c.bf16 %v847, %v847
    %v855 = vunpack.c.l.b16 %v841
    %v856 = vunpack.c.l.b16 %v842
    %v857 = vunpack.c.l.b16 %v843
    %v858 = vunpack.c.l.b16 %v844
    %v859 = vpack.c.b16 %v856, %v855
    %v860 = vpack.c.b16 %v858, %v857
    %v864 = vsel %vm260, %v850, 0
    %866 = vmatprep.subr.bf16.mxu0 0
    %867 = vmatpush1.bf16.msra.mxu0 0
    %868 = vmatprep.subr.bf16.mxu0 0
    %869 = vmatpush1.bf16.msra.mxu0 0
    %870 = vmatprep.subr.bf16.mxu0 0
    %871 = vmatpush1.bf16.msra.mxu0 0
    %872 = vmatprep.subr.bf16.mxu0 0
    %873 = vmatpush1.bf16.msra.mxu0 0
    %874 = vmatprep.subr.bf16.mxu0 0
    %875 = vmatpush1.bf16.msra.mxu0 0
    %876 = vmatprep.subr.bf16.mxu0 0
    %877 = vmatpush1.bf16.msra.mxu0 0
    %878 = vmatprep.subr.bf16.mxu0 0
    %879 = vmatpush1.bf16.msra.mxu0 %v860
    %880 = vmatprep.subr.bf16.mxu0 0
    %881 = vmatpush1.bf16.msra.mxu0 %v859
    %882 = vmatprep.subr.bf16.mxu0 0
    %883 = vmatpush2.bf16.msra.mxu0 0
    %884 = vmatprep.subr.bf16.mxu0 0
    %885 = vmatpush2.bf16.msra.mxu0 0
    %886 = vmatprep.subr.bf16.mxu0 0
    %887 = vmatpush2.bf16.msra.mxu0 0
    %888 = vmatprep.subr.bf16.mxu0 0
    %889 = vmatpush2.bf16.msra.mxu0 0
    %890 = vmatprep.subr.bf16.mxu0 0
    %891 = vmatpush2.bf16.msra.mxu0 0
    %892 = vmatprep.subr.bf16.mxu0 0
    %893 = vmatpush2.bf16.msra.mxu0 0
    %894 = vmatprep.subr.bf16.mxu0 0
    %895 = vmatpush2.bf16.msra.mxu0 0
    %896 = vmatprep.subr.bf16.mxu0 0
    %897 = vmatpush2.bf16.msra.mxu0 0
    %898 = vmatprep.mubr.bf16.mxu0 0
    %899 = vmatmul.mubr.bf16.gmra.mxu0 %v864
    %v900 = vpop.f32.mrf.mxu0
    %v901 = vadd.f32 0.0, %v900
    %v902 = vpop.f32.mrf.mxu0
    %v903 = vpop.f32.mrf.mxu0
    %v904 = vpop.f32.mrf.mxu0
    %905 = vdwg.mxu0
    %v910 = vunpack.c.l.b16 %v837
    %v911 = vunpack.c.l.b16 %v838
    %v912 = vunpack.c.l.b16 %v839
    %v913 = vunpack.c.l.b16 %v840
    %v914 = vpack.c.b16 %v911, %v910
    %v915 = vpack.c.b16 %v913, %v912
    %918 = vmatprep.subr.bf16.mxu0 0
    %919 = vmatpush1.bf16.msra.mxu0 0
    %920 = vmatprep.subr.bf16.mxu0 0
    %921 = vmatpush1.bf16.msra.mxu0 0
    %922 = vmatprep.subr.bf16.mxu0 0
    %923 = vmatpush1.bf16.msra.mxu0 0
    %924 = vmatprep.subr.bf16.mxu0 0
    %925 = vmatpush1.bf16.msra.mxu0 0
    %926 = vmatprep.subr.bf16.mxu0 0
    %927 = vmatpush1.bf16.msra.mxu0 0
    %928 = vmatprep.subr.bf16.mxu0 0
    %929 = vmatpush1.bf16.msra.mxu0 0
    %930 = vmatprep.subr.bf16.mxu0 0
    %931 = vmatpush1.bf16.msra.mxu0 %v915
    %932 = vmatprep.subr.bf16.mxu0 0
    %933 = vmatpush1.bf16.msra.mxu0 %v914
    %934 = vmatprep.subr.bf16.mxu0 0
    %935 = vmatpush2.bf16.msra.mxu0 0
    %936 = vmatprep.subr.bf16.mxu0 0
    %937 = vmatpush2.bf16.msra.mxu0 0
    %938 = vmatprep.subr.bf16.mxu0 0
    %939 = vmatpush2.bf16.msra.mxu0 0
    %940 = vmatprep.subr.bf16.mxu0 0
    %941 = vmatpush2.bf16.msra.mxu0 0
    %942 = vmatprep.subr.bf16.mxu0 0
    %943 = vmatpush2.bf16.msra.mxu0 0
    %944 = vmatprep.subr.bf16.mxu0 0
    %945 = vmatpush2.bf16.msra.mxu0 0
    %946 = vmatprep.subr.bf16.mxu0 0
    %947 = vmatpush2.bf16.msra.mxu0 0
    %948 = vmatprep.subr.bf16.mxu0 0
    %949 = vmatpush2.bf16.msra.mxu0 0
    %950 = vmatprep.mubr.bf16.mxu0 0
    %951 = vmatmul.mubr.bf16.gmra.mxu0 %v338
    %v952 = vpop.f32.mrf.mxu0
    %v953 = vadd.f32 %v901, %v952
    %v954 = vpop.f32.mrf.mxu0
    %v955 = vpop.f32.mrf.mxu0
    %v956 = vpop.f32.mrf.mxu0
    %957 = vdwg.mxu0
    %v959 = vlaneseq
    %v960 = vshrl.u32 %v959, 7
    %v961 = vsub.s32 0, %v960
    %v962 = vrot.slane %v845, %v961
    %v964 = vadd.f32 %v953, %v962
    %v965 = vxor.u32 %v964, 2147483648
    %v966 = vmul.f32 %v965, 1.442695
    %v967 = vpow.pop %v966
    %v968 = vadd.f32 %v967, 1.0
    %v969 = vrcp.pop %v968
    %v970 = vmul.f32 1.0, %v969
    %v971 = vtanh.pop %v964
    %973 = vrot.lane.b32.xlu0 %v849, 32
    %v974 = vpop.permute.xlu0 %973
    %v976 = vmul.f32 %v970, %v974
    %978 = vrot.lane.b32.xlu0 %v971, 64
    %v979 = vpop.permute.xlu0 %978
    %v981 = vmul.f32 %v970, %v979
    %983 = vrot.lane.b32.xlu0 %v981, 32
    %v984 = vpop.permute.xlu0 %983
    %v986 = vadd.f32 %v976, %v984
    %v987 = vtanh.pop %v986
    %989 = vrot.lane.b32.xlu0 %v987, 64
    %v990 = vpop.permute.xlu0 %989
    %v992 = vmul.f32 %v970, %v990
    %v993 = vpack.c.bf16 %v992, %v992
    %995 = vrot.lane.b32.xlu0 %v993, 32
    %v996 = vpop.permute.xlu0 %995
    %v998 = vsel %vm260, %v996, 0
    %1000 = vmatprep.subr.bf16.mxu0 0
    %1001 = vmatpush1.bf16.msra.mxu0 0
    %1002 = vmatprep.subr.bf16.mxu0 0
    %1003 = vmatpush1.bf16.msra.mxu0 0
    %1004 = vmatprep.subr.bf16.mxu0 0
    %1005 = vmatpush1.bf16.msra.mxu0 0
    %1006 = vmatprep.subr.bf16.mxu0 0
    %1007 = vmatpush1.bf16.msra.mxu0 0
    %1008 = vmatprep.subr.bf16.mxu0 0
    %1009 = vmatpush1.bf16.msra.mxu0 0
    %1010 = vmatprep.subr.bf16.mxu0 0
    %1011 = vmatpush1.bf16.msra.mxu0 0
    %1012 = vmatprep.subr.bf16.mxu0 0
    %1013 = vmatpush1.bf16.msra.mxu0 %v860
    %1014 = vmatprep.subr.bf16.mxu0 0
    %1015 = vmatpush1.bf16.msra.mxu0 %v859
    %1016 = vmatprep.subr.bf16.mxu0 0
    %1017 = vmatpush2.bf16.msra.mxu0 0
    %1018 = vmatprep.subr.bf16.mxu0 0
    %1019 = vmatpush2.bf16.msra.mxu0 0
    %1020 = vmatprep.subr.bf16.mxu0 0
    %1021 = vmatpush2.bf16.msra.mxu0 0
    %1022 = vmatprep.subr.bf16.mxu0 0
    %1023 = vmatpush2.bf16.msra.mxu0 0
    %1024 = vmatprep.subr.bf16.mxu0 0
    %1025 = vmatpush2.bf16.msra.mxu0 0
    %1026 = vmatprep.subr.bf16.mxu0 0
    %1027 = vmatpush2.bf16.msra.mxu0 0
    %1028 = vmatprep.subr.bf16.mxu0 0
    %1029 = vmatpush2.bf16.msra.mxu0 0
    %1030 = vmatprep.subr.bf16.mxu0 0
    %1031 = vmatpush2.bf16.msra.mxu0 0
    %1032 = vmatprep.mubr.bf16.mxu0 0
    %1033 = vmatmul.mubr.bf16.gmra.mxu0 %v998
    %v1034 = vpop.f32.mrf.mxu0
    %v1035 = vadd.f32 0.0, %v1034
    %v1036 = vpop.f32.mrf.mxu0
    %v1037 = vpop.f32.mrf.mxu0
    %v1038 = vpop.f32.mrf.mxu0
    %1039 = vdwg.mxu0
    %1040 = vmatprep.subr.bf16.mxu0 0
    %1041 = vmatpush1.bf16.msra.mxu0 0
    %1042 = vmatprep.subr.bf16.mxu0 0
    %1043 = vmatpush1.bf16.msra.mxu0 0
    %1044 = vmatprep.subr.bf16.mxu0 0
    %1045 = vmatpush1.bf16.msra.mxu0 0
    %1046 = vmatprep.subr.bf16.mxu0 0
    %1047 = vmatpush1.bf16.msra.mxu0 0
    %1048 = vmatprep.subr.bf16.mxu0 0
    %1049 = vmatpush1.bf16.msra.mxu0 0
    %1050 = vmatprep.subr.bf16.mxu0 0
    %1051 = vmatpush1.bf16.msra.mxu0 0
    %1052 = vmatprep.subr.bf16.mxu0 0
    %1053 = vmatpush1.bf16.msra.mxu0 %v915
    %1054 = vmatprep.subr.bf16.mxu0 0
    %1055 = vmatpush1.bf16.msra.mxu0 %v914
    %1056 = vmatprep.subr.bf16.mxu0 0
    %1057 = vmatpush2.bf16.msra.mxu0 0
    %1058 = vmatprep.subr.bf16.mxu0 0
    %1059 = vmatpush2.bf16.msra.mxu0 0
    %1060 = vmatprep.subr.bf16.mxu0 0
    %1061 = vmatpush2.bf16.msra.mxu0 0
    %1062 = vmatprep.subr.bf16.mxu0 0
    %1063 = vmatpush2.bf16.msra.mxu0 0
    %1064 = vmatprep.subr.bf16.mxu0 0
    %1065 = vmatpush2.bf16.msra.mxu0 0
    %1066 = vmatprep.subr.bf16.mxu0 0
    %1067 = vmatpush2.bf16.msra.mxu0 0
    %1068 = vmatprep.subr.bf16.mxu0 0
    %1069 = vmatpush2.bf16.msra.mxu0 0
    %1070 = vmatprep.subr.bf16.mxu0 0
    %1071 = vmatpush2.bf16.msra.mxu0 0
    %1072 = vmatprep.mubr.bf16.mxu0 0
    %1073 = vmatmul.mubr.bf16.gmra.mxu0 %v410
    %v1074 = vpop.f32.mrf.mxu0
    %v1075 = vadd.f32 %v1035, %v1074
    %v1076 = vpop.f32.mrf.mxu0
    %v1077 = vpop.f32.mrf.mxu0
    %v1078 = vpop.f32.mrf.mxu0
    %1079 = vdwg.mxu0
    %v1080 = vadd.f32 %v1075, %v962
    %v1081 = vxor.u32 %v1080, 2147483648
    %v1082 = vmul.f32 %v1081, 1.442695
    %v1083 = vpow.pop %v1082
    %v1084 = vadd.f32 %v1083, 1.0
    %v1085 = vrcp.pop %v1084
    %v1086 = vmul.f32 1.0, %v1085
    %v1087 = vtanh.pop %v1080
    %v1088 = vmul.f32 %v1086, %v986
    %1090 = vrot.lane.b32.xlu0 %v1087, 64
    %v1091 = vpop.permute.xlu0 %1090
    %v1093 = vmul.f32 %v1086, %v1091
    %1095 = vrot.lane.b32.xlu0 %v1093, 32
    %v1096 = vpop.permute.xlu0 %1095
    %v1098 = vadd.f32 %v1088, %v1096
    %v1099 = vtanh.pop %v1098
    %1101 = vrot.lane.b32.xlu0 %v1099, 64
    %v1102 = vpop.permute.xlu0 %1101
    %v1104 = vmul.f32 %v1086, %v1102
    %v1105 = vpack.c.bf16 %v1104, %v1104
    %1107 = vrot.lane.b32.xlu0 %v1105, 32
    %v1108 = vpop.permute.xlu0 %1107
    %v1110 = vsel %vm260, %v1108, 0
    %1112 = vmatprep.subr.bf16.mxu0 0
    %1113 = vmatpush1.bf16.msra.mxu0 0
    %1114 = vmatprep.subr.bf16.mxu0 0
    %1115 = vmatpush1.bf16.msra.mxu0 0
    %1116 = vmatprep.subr.bf16.mxu0 0
    %1117 = vmatpush1.bf16.msra.mxu0 0
    %1118 = vmatprep.subr.bf16.mxu0 0
    %1119 = vmatpush1.bf16.msra.mxu0 0
    %1120 = vmatprep.subr.bf16.mxu0 0
    %1121 = vmatpush1.bf16.msra.mxu0 0
    %1122 = vmatprep.subr.bf16.mxu0 0
    %1123 = vmatpush1.bf16.msra.mxu0 0
    %1124 = vmatprep.subr.bf16.mxu0 0
    %1125 = vmatpush1.bf16.msra.mxu0 %v860
    %1126 = vmatprep.subr.bf16.mxu0 0
    %1127 = vmatpush1.bf16.msra.mxu0 %v859
    %1128 = vmatprep.subr.bf16.mxu0 0
    %1129 = vmatpush2.bf16.msra.mxu0 0
    %1130 = vmatprep.subr.bf16.mxu0 0
    %1131 = vmatpush2.bf16.msra.mxu0 0
    %1132 = vmatprep.subr.bf16.mxu0 0
    %1133 = vmatpush2.bf16.msra.mxu0 0
    %1134 = vmatprep.subr.bf16.mxu0 0
    %1135 = vmatpush2.bf16.msra.mxu0 0
    %1136 = vmatprep.subr.bf16.mxu0 0
    %1137 = vmatpush2.bf16.msra.mxu0 0
    %1138 = vmatprep.subr.bf16.mxu0 0
    %1139 = vmatpush2.bf16.msra.mxu0 0
    %1140 = vmatprep.subr.bf16.mxu0 0
    %1141 = vmatpush2.bf16.msra.mxu0 0
    %1142 = vmatprep.subr.bf16.mxu0 0
    %1143 = vmatpush2.bf16.msra.mxu0 0
    %1144 = vmatprep.mubr.bf16.mxu0 0
    %1145 = vmatmul.mubr.bf16.gmra.mxu0 %v1110
    %v1146 = vpop.f32.mrf.mxu0
    %v1147 = vadd.f32 0.0, %v1146
    %v1148 = vpop.f32.mrf.mxu0
    %v1149 = vpop.f32.mrf.mxu0
    %v1150 = vpop.f32.mrf.mxu0
    %1151 = vdwg.mxu0
    %1152 = vmatprep.subr.bf16.mxu0 0
    %1153 = vmatpush1.bf16.msra.mxu0 0
    %1154 = vmatprep.subr.bf16.mxu0 0
    %1155 = vmatpush1.bf16.msra.mxu0 0
    %1156 = vmatprep.subr.bf16.mxu0 0
    %1157 = vmatpush1.bf16.msra.mxu0 0
    %1158 = vmatprep.subr.bf16.mxu0 0
    %1159 = vmatpush1.bf16.msra.mxu0 0
    %1160 = vmatprep.subr.bf16.mxu0 0
    %1161 = vmatpush1.bf16.msra.mxu0 0
    %1162 = vmatprep.subr.bf16.mxu0 0
    %1163 = vmatpush1.bf16.msra.mxu0 0
    %1164 = vmatprep.subr.bf16.mxu0 0
    %1165 = vmatpush1.bf16.msra.mxu0 %v915
    %1166 = vmatprep.subr.bf16.mxu0 0
    %1167 = vmatpush1.bf16.msra.mxu0 %v914
    %1168 = vmatprep.subr.bf16.mxu0 0
    %1169 = vmatpush2.bf16.msra.mxu0 0
    %1170 = vmatprep.subr.bf16.mxu0 0
    %1171 = vmatpush2.bf16.msra.mxu0 0
    %1172 = vmatprep.subr.bf16.mxu0 0
    %1173 = vmatpush2.bf16.msra.mxu0 0
    %1174 = vmatprep.subr.bf16.mxu0 0
    %1175 = vmatpush2.bf16.msra.mxu0 0
    %1176 = vmatprep.subr.bf16.mxu0 0
    %1177 = vmatpush2.bf16.msra.mxu0 0
    %1178 = vmatprep.subr.bf16.mxu0 0
    %1179 = vmatpush2.bf16.msra.mxu0 0
    %1180 = vmatprep.subr.bf16.mxu0 0
    %1181 = vmatpush2.bf16.msra.mxu0 0
    %1182 = vmatprep.subr.bf16.mxu0 0
    %1183 = vmatpush2.bf16.msra.mxu0 0
    %1184 = vmatprep.mubr.bf16.mxu0 0
    %1185 = vmatmul.mubr.bf16.gmra.mxu0 %v482
    %v1186 = vpop.f32.mrf.mxu0
    %v1187 = vadd.f32 %v1147, %v1186
    %v1188 = vpop.f32.mrf.mxu0
    %v1189 = vpop.f32.mrf.mxu0
    %v1190 = vpop.f32.mrf.mxu0
    %1191 = vdwg.mxu0
    %v1192 = vadd.f32 %v1187, %v962
    %v1193 = vxor.u32 %v1192, 2147483648
    %v1194 = vmul.f32 %v1193, 1.442695
    %v1195 = vpow.pop %v1194
    %v1196 = vadd.f32 %v1195, 1.0
    %v1197 = vrcp.pop %v1196
    %v1198 = vmul.f32 1.0, %v1197
    %v1199 = vtanh.pop %v1192
    %v1200 = vmul.f32 %v1198, %v1098
    %1202 = vrot.lane.b32.xlu0 %v1199, 64
    %v1203 = vpop.permute.xlu0 %1202
    %v1205 = vmul.f32 %v1198, %v1203
    %1207 = vrot.lane.b32.xlu0 %v1205, 32
    %v1208 = vpop.permute.xlu0 %1207
    %v1210 = vadd.f32 %v1200, %v1208
    %v1211 = vtanh.pop %v1210
    %1213 = vrot.lane.b32.xlu0 %v1211, 64
    %v1214 = vpop.permute.xlu0 %1213
    %v1216 = vmul.f32 %v1198, %v1214
    %v1217 = vpack.c.bf16 %v1216, %v1216
    %1219 = vrot.lane.b32.xlu0 %v1217, 32
    %v1220 = vpop.permute.xlu0 %1219
    %v1222 = vsel %vm260, %v1220, 0
    %1224 = vmatprep.subr.bf16.mxu0 0
    %1225 = vmatpush1.bf16.msra.mxu0 0
    %1226 = vmatprep.subr.bf16.mxu0 0
    %1227 = vmatpush1.bf16.msra.mxu0 0
    %1228 = vmatprep.subr.bf16.mxu0 0
    %1229 = vmatpush1.bf16.msra.mxu0 0
    %1230 = vmatprep.subr.bf16.mxu0 0
    %1231 = vmatpush1.bf16.msra.mxu0 0
    %1232 = vmatprep.subr.bf16.mxu0 0
    %1233 = vmatpush1.bf16.msra.mxu0 0
    %1234 = vmatprep.subr.bf16.mxu0 0
    %1235 = vmatpush1.bf16.msra.mxu0 0
    %1236 = vmatprep.subr.bf16.mxu0 0
    %1237 = vmatpush1.bf16.msra.mxu0 %v860
    %1238 = vmatprep.subr.bf16.mxu0 0
    %1239 = vmatpush1.bf16.msra.mxu0 %v859
    %1240 = vmatprep.subr.bf16.mxu0 0
    %1241 = vmatpush2.bf16.msra.mxu0 0
    %1242 = vmatprep.subr.bf16.mxu0 0
    %1243 = vmatpush2.bf16.msra.mxu0 0
    %1244 = vmatprep.subr.bf16.mxu0 0
    %1245 = vmatpush2.bf16.msra.mxu0 0
    %1246 = vmatprep.subr.bf16.mxu0 0
    %1247 = vmatpush2.bf16.msra.mxu0 0
    %1248 = vmatprep.subr.bf16.mxu0 0
    %1249 = vmatpush2.bf16.msra.mxu0 0
    %1250 = vmatprep.subr.bf16.mxu0 0
    %1251 = vmatpush2.bf16.msra.mxu0 0
    %1252 = vmatprep.subr.bf16.mxu0 0
    %1253 = vmatpush2.bf16.msra.mxu0 0
    %1254 = vmatprep.subr.bf16.mxu0 0
    %1255 = vmatpush2.bf16.msra.mxu0 0
    %1256 = vmatprep.mubr.bf16.mxu0 0
    %1257 = vmatmul.mubr.bf16.gmra.mxu0 %v1222
    %v1258 = vpop.f32.mrf.mxu0
    %v1259 = vadd.f32 0.0, %v1258
    %v1260 = vpop.f32.mrf.mxu0
    %v1261 = vpop.f32.mrf.mxu0
    %v1262 = vpop.f32.mrf.mxu0
    %1263 = vdwg.mxu0
    %1264 = vmatprep.subr.bf16.mxu0 0
    %1265 = vmatpush1.bf16.msra.mxu0 0
    %1266 = vmatprep.subr.bf16.mxu0 0
    %1267 = vmatpush1.bf16.msra.mxu0 0
    %1268 = vmatprep.subr.bf16.mxu0 0
    %1269 = vmatpush1.bf16.msra.mxu0 0
    %1270 = vmatprep.subr.bf16.mxu0 0
    %1271 = vmatpush1.bf16.msra.mxu0 0
    %1272 = vmatprep.subr.bf16.mxu0 0
    %1273 = vmatpush1.bf16.msra.mxu0 0
    %1274 = vmatprep.subr.bf16.mxu0 0
    %1275 = vmatpush1.bf16.msra.mxu0 0
    %1276 = vmatprep.subr.bf16.mxu0 0
    %1277 = vmatpush1.bf16.msra.mxu0 %v915
    %1278 = vmatprep.subr.bf16.mxu0 0
    %1279 = vmatpush1.bf16.msra.mxu0 %v914
    %1280 = vmatprep.subr.bf16.mxu0 0
    %1281 = vmatpush2.bf16.msra.mxu0 0
    %1282 = vmatprep.subr.bf16.mxu0 0
    %1283 = vmatpush2.bf16.msra.mxu0 0
    %1284 = vmatprep.subr.bf16.mxu0 0
    %1285 = vmatpush2.bf16.msra.mxu0 0
    %1286 = vmatprep.subr.bf16.mxu0 0
    %1287 = vmatpush2.bf16.msra.mxu0 0
    %1288 = vmatprep.subr.bf16.mxu0 0
    %1289 = vmatpush2.bf16.msra.mxu0 0
    %1290 = vmatprep.subr.bf16.mxu0 0
    %1291 = vmatpush2.bf16.msra.mxu0 0
    %1292 = vmatprep.subr.bf16.mxu0 0
    %1293 = vmatpush2.bf16.msra.mxu0 0
    %1294 = vmatprep.subr.bf16.mxu0 0
    %1295 = vmatpush2.bf16.msra.mxu0 0
    %1296 = vmatprep.mubr.bf16.mxu0 0
    %1297 = vmatmul.mubr.bf16.gmra.mxu0 %v554
    %v1298 = vpop.f32.mrf.mxu0
    %v1299 = vadd.f32 %v1259, %v1298
    %v1300 = vpop.f32.mrf.mxu0
    %v1301 = vpop.f32.mrf.mxu0
    %v1302 = vpop.f32.mrf.mxu0
    %1303 = vdwg.mxu0
    %v1304 = vadd.f32 %v1299, %v962
    %v1305 = vxor.u32 %v1304, 2147483648
    %v1306 = vmul.f32 %v1305, 1.442695
    %v1307 = vpow.pop %v1306
    %v1308 = vadd.f32 %v1307, 1.0
    %v1309 = vrcp.pop %v1308
    %v1310 = vmul.f32 1.0, %v1309
    %v1311 = vtanh.pop %v1304
    %v1312 = vmul.f32 %v1310, %v1210
    %1314 = vrot.lane.b32.xlu0 %v1311, 64
    %v1315 = vpop.permute.xlu0 %1314
    %v1317 = vmul.f32 %v1310, %v1315
    %1319 = vrot.lane.b32.xlu0 %v1317, 32
    %v1320 = vpop.permute.xlu0 %1319
    %v1322 = vadd.f32 %v1312, %v1320
    %v1323 = vtanh.pop %v1322
    %1325 = vrot.lane.b32.xlu0 %v1323, 64
    %v1326 = vpop.permute.xlu0 %1325
    %v1328 = vmul.f32 %v1310, %v1326
    %v1329 = vpack.c.bf16 %v1328, %v1328
    %1331 = vrot.lane.b32.xlu0 %v1329, 32
    %v1332 = vpop.permute.xlu0 %1331
    %v1334 = vsel %vm260, %v1332, 0
    %1336 = vmatprep.subr.bf16.mxu0 0
    %1337 = vmatpush1.bf16.msra.mxu0 0
    %1338 = vmatprep.subr.bf16.mxu0 0
    %1339 = vmatpush1.bf16.msra.mxu0 0
    %1340 = vmatprep.subr.bf16.mxu0 0
    %1341 = vmatpush1.bf16.msra.mxu0 0
    %1342 = vmatprep.subr.bf16.mxu0 0
    %1343 = vmatpush1.bf16.msra.mxu0 0
    %1344 = vmatprep.subr.bf16.mxu0 0
    %1345 = vmatpush1.bf16.msra.mxu0 0
    %1346 = vmatprep.subr.bf16.mxu0 0
    %1347 = vmatpush1.bf16.msra.mxu0 0
    %1348 = vmatprep.subr.bf16.mxu0 0
    %1349 = vmatpush1.bf16.msra.mxu0 %v860
    %1350 = vmatprep.subr.bf16.mxu0 0
    %1351 = vmatpush1.bf16.msra.mxu0 %v859
    %1352 = vmatprep.subr.bf16.mxu0 0
    %1353 = vmatpush2.bf16.msra.mxu0 0
    %1354 = vmatprep.subr.bf16.mxu0 0
    %1355 = vmatpush2.bf16.msra.mxu0 0
    %1356 = vmatprep.subr.bf16.mxu0 0
    %1357 = vmatpush2.bf16.msra.mxu0 0
    %1358 = vmatprep.subr.bf16.mxu0 0
    %1359 = vmatpush2.bf16.msra.mxu0 0
    %1360 = vmatprep.subr.bf16.mxu0 0
    %1361 = vmatpush2.bf16.msra.mxu0 0
    %1362 = vmatprep.subr.bf16.mxu0 0
    %1363 = vmatpush2.bf16.msra.mxu0 0
    %1364 = vmatprep.subr.bf16.mxu0 0
    %1365 = vmatpush2.bf16.msra.mxu0 0
    %1366 = vmatprep.subr.bf16.mxu0 0
    %1367 = vmatpush2.bf16.msra.mxu0 0
    %1368 = vmatprep.mubr.bf16.mxu0 0
    %1369 = vmatmul.mubr.bf16.gmra.mxu0 %v1334
    %v1370 = vpop.f32.mrf.mxu0
    %v1371 = vadd.f32 0.0, %v1370
    %v1372 = vpop.f32.mrf.mxu0
    %v1373 = vpop.f32.mrf.mxu0
    %v1374 = vpop.f32.mrf.mxu0
    %1375 = vdwg.mxu0
    %1376 = vmatprep.subr.bf16.mxu0 0
    %1377 = vmatpush1.bf16.msra.mxu0 0
    %1378 = vmatprep.subr.bf16.mxu0 0
    %1379 = vmatpush1.bf16.msra.mxu0 0
    %1380 = vmatprep.subr.bf16.mxu0 0
    %1381 = vmatpush1.bf16.msra.mxu0 0
    %1382 = vmatprep.subr.bf16.mxu0 0
    %1383 = vmatpush1.bf16.msra.mxu0 0
    %1384 = vmatprep.subr.bf16.mxu0 0
    %1385 = vmatpush1.bf16.msra.mxu0 0
    %1386 = vmatprep.subr.bf16.mxu0 0
    %1387 = vmatpush1.bf16.msra.mxu0 0
    %1388 = vmatprep.subr.bf16.mxu0 0
    %1389 = vmatpush1.bf16.msra.mxu0 %v915
    %1390 = vmatprep.subr.bf16.mxu0 0
    %1391 = vmatpush1.bf16.msra.mxu0 %v914
    %1392 = vmatprep.subr.bf16.mxu0 0
    %1393 = vmatpush2.bf16.msra.mxu0 0
    %1394 = vmatprep.subr.bf16.mxu0 0
    %1395 = vmatpush2.bf16.msra.mxu0 0
    %1396 = vmatprep.subr.bf16.mxu0 0
    %1397 = vmatpush2.bf16.msra.mxu0 0
    %1398 = vmatprep.subr.bf16.mxu0 0
    %1399 = vmatpush2.bf16.msra.mxu0 0
    %1400 = vmatprep.subr.bf16.mxu0 0
    %1401 = vmatpush2.bf16.msra.mxu0 0
    %1402 = vmatprep.subr.bf16.mxu0 0
    %1403 = vmatpush2.bf16.msra.mxu0 0
    %1404 = vmatprep.subr.bf16.mxu0 0
    %1405 = vmatpush2.bf16.msra.mxu0 0
    %1406 = vmatprep.subr.bf16.mxu0 0
    %1407 = vmatpush2.bf16.msra.mxu0 0
    %1408 = vmatprep.mubr.bf16.mxu0 0
    %1409 = vmatmul.mubr.bf16.gmra.mxu0 %v626
    %v1410 = vpop.f32.mrf.mxu0
    %v1411 = vadd.f32 %v1371, %v1410
    %v1412 = vpop.f32.mrf.mxu0
    %v1413 = vpop.f32.mrf.mxu0
    %v1414 = vpop.f32.mrf.mxu0
    %1415 = vdwg.mxu0
    %v1416 = vadd.f32 %v1411, %v962
    %v1417 = vxor.u32 %v1416, 2147483648
    %v1418 = vmul.f32 %v1417, 1.442695
    %v1419 = vpow.pop %v1418
    %v1420 = vadd.f32 %v1419, 1.0
    %v1421 = vrcp.pop %v1420
    %v1422 = vmul.f32 1.0, %v1421
    %v1423 = vtanh.pop %v1416
    %v1424 = vmul.f32 %v1422, %v1322
    %1426 = vrot.lane.b32.xlu0 %v1423, 64
    %v1427 = vpop.permute.xlu0 %1426
    %v1429 = vmul.f32 %v1422, %v1427
    %1431 = vrot.lane.b32.xlu0 %v1429, 32
    %v1432 = vpop.permute.xlu0 %1431
    %v1434 = vadd.f32 %v1424, %v1432
    %v1435 = vtanh.pop %v1434
    %1437 = vrot.lane.b32.xlu0 %v1435, 64
    %v1438 = vpop.permute.xlu0 %1437
    %v1440 = vmul.f32 %v1422, %v1438
    %v1441 = vpack.c.bf16 %v1440, %v1440
    %1443 = vrot.lane.b32.xlu0 %v1441, 32
    %v1444 = vpop.permute.xlu0 %1443
    %v1446 = vsel %vm260, %v1444, 0
    %1448 = vmatprep.subr.bf16.mxu0 0
    %1449 = vmatpush1.bf16.msra.mxu0 0
    %1450 = vmatprep.subr.bf16.mxu0 0
    %1451 = vmatpush1.bf16.msra.mxu0 0
    %1452 = vmatprep.subr.bf16.mxu0 0
    %1453 = vmatpush1.bf16.msra.mxu0 0
    %1454 = vmatprep.subr.bf16.mxu0 0
    %1455 = vmatpush1.bf16.msra.mxu0 0
    %1456 = vmatprep.subr.bf16.mxu0 0
    %1457 = vmatpush1.bf16.msra.mxu0 0
    %1458 = vmatprep.subr.bf16.mxu0 0
    %1459 = vmatpush1.bf16.msra.mxu0 0
    %1460 = vmatprep.subr.bf16.mxu0 0
    %1461 = vmatpush1.bf16.msra.mxu0 %v860
    %1462 = vmatprep.subr.bf16.mxu0 0
    %1463 = vmatpush1.bf16.msra.mxu0 %v859
    %1464 = vmatprep.subr.bf16.mxu0 0
    %1465 = vmatpush2.bf16.msra.mxu0 0
    %1466 = vmatprep.subr.bf16.mxu0 0
    %1467 = vmatpush2.bf16.msra.mxu0 0
    %1468 = vmatprep.subr.bf16.mxu0 0
    %1469 = vmatpush2.bf16.msra.mxu0 0
    %1470 = vmatprep.subr.bf16.mxu0 0
    %1471 = vmatpush2.bf16.msra.mxu0 0
    %1472 = vmatprep.subr.bf16.mxu0 0
    %1473 = vmatpush2.bf16.msra.mxu0 0
    %1474 = vmatprep.subr.bf16.mxu0 0
    %1475 = vmatpush2.bf16.msra.mxu0 0
    %1476 = vmatprep.subr.bf16.mxu0 0
    %1477 = vmatpush2.bf16.msra.mxu0 0
    %1478 = vmatprep.subr.bf16.mxu0 0
    %1479 = vmatpush2.bf16.msra.mxu0 0
    %1480 = vmatprep.mubr.bf16.mxu0 0
    %1481 = vmatmul.mubr.bf16.gmra.mxu0 %v1446
    %v1482 = vpop.f32.mrf.mxu0
    %v1483 = vadd.f32 0.0, %v1482
    %v1484 = vpop.f32.mrf.mxu0
    %v1485 = vpop.f32.mrf.mxu0
    %v1486 = vpop.f32.mrf.mxu0
    %1487 = vdwg.mxu0
    %1488 = vmatprep.subr.bf16.mxu0 0
    %1489 = vmatpush1.bf16.msra.mxu0 0
    %1490 = vmatprep.subr.bf16.mxu0 0
    %1491 = vmatpush1.bf16.msra.mxu0 0
    %1492 = vmatprep.subr.bf16.mxu0 0
    %1493 = vmatpush1.bf16.msra.mxu0 0
    %1494 = vmatprep.subr.bf16.mxu0 0
    %1495 = vmatpush1.bf16.msra.mxu0 0
    %1496 = vmatprep.subr.bf16.mxu0 0
    %1497 = vmatpush1.bf16.msra.mxu0 0
    %1498 = vmatprep.subr.bf16.mxu0 0
    %1499 = vmatpush1.bf16.msra.mxu0 0
    %1500 = vmatprep.subr.bf16.mxu0 0
    %1501 = vmatpush1.bf16.msra.mxu0 %v915
    %1502 = vmatprep.subr.bf16.mxu0 0
    %1503 = vmatpush1.bf16.msra.mxu0 %v914
    %1504 = vmatprep.subr.bf16.mxu0 0
    %1505 = vmatpush2.bf16.msra.mxu0 0
    %1506 = vmatprep.subr.bf16.mxu0 0
    %1507 = vmatpush2.bf16.msra.mxu0 0
    %1508 = vmatprep.subr.bf16.mxu0 0
    %1509 = vmatpush2.bf16.msra.mxu0 0
    %1510 = vmatprep.subr.bf16.mxu0 0
    %1511 = vmatpush2.bf16.msra.mxu0 0
    %1512 = vmatprep.subr.bf16.mxu0 0
    %1513 = vmatpush2.bf16.msra.mxu0 0
    %1514 = vmatprep.subr.bf16.mxu0 0
    %1515 = vmatpush2.bf16.msra.mxu0 0
    %1516 = vmatprep.subr.bf16.mxu0 0
    %1517 = vmatpush2.bf16.msra.mxu0 0
    %1518 = vmatprep.subr.bf16.mxu0 0
    %1519 = vmatpush2.bf16.msra.mxu0 0
    %1520 = vmatprep.mubr.bf16.mxu0 0
    %1521 = vmatmul.mubr.bf16.gmra.mxu0 %v698
    %v1522 = vpop.f32.mrf.mxu0
    %v1523 = vadd.f32 %v1483, %v1522
    %v1524 = vpop.f32.mrf.mxu0
    %v1525 = vpop.f32.mrf.mxu0
    %v1526 = vpop.f32.mrf.mxu0
    %1527 = vdwg.mxu0
    %v1528 = vadd.f32 %v1523, %v962
    %v1529 = vxor.u32 %v1528, 2147483648
    %v1530 = vmul.f32 %v1529, 1.442695
    %v1531 = vpow.pop %v1530
    %v1532 = vadd.f32 %v1531, 1.0
    %v1533 = vrcp.pop %v1532
    %v1534 = vmul.f32 1.0, %v1533
    %v1535 = vtanh.pop %v1528
    %v1536 = vmul.f32 %v1534, %v1434
    %1538 = vrot.lane.b32.xlu0 %v1535, 64
    %v1539 = vpop.permute.xlu0 %1538
    %v1541 = vmul.f32 %v1534, %v1539
    %1543 = vrot.lane.b32.xlu0 %v1541, 32
    %v1544 = vpop.permute.xlu0 %1543
    %v1546 = vadd.f32 %v1536, %v1544
    %v1547 = vtanh.pop %v1546
    %1549 = vrot.lane.b32.xlu0 %v1547, 64
    %v1550 = vpop.permute.xlu0 %1549
    %v1552 = vmul.f32 %v1534, %v1550
    %v1553 = vpack.c.bf16 %v1552, %v1552
    %1555 = vrot.lane.b32.xlu0 %v1553, 32
    %v1556 = vpop.permute.xlu0 %1555
    %v1558 = vsel %vm260, %v1556, 0
    %1560 = vmatprep.subr.bf16.mxu0 0
    %1561 = vmatpush1.bf16.msra.mxu0 0
    %1562 = vmatprep.subr.bf16.mxu0 0
    %1563 = vmatpush1.bf16.msra.mxu0 0
    %1564 = vmatprep.subr.bf16.mxu0 0
    %1565 = vmatpush1.bf16.msra.mxu0 0
    %1566 = vmatprep.subr.bf16.mxu0 0
    %1567 = vmatpush1.bf16.msra.mxu0 0
    %1568 = vmatprep.subr.bf16.mxu0 0
    %1569 = vmatpush1.bf16.msra.mxu0 0
    %1570 = vmatprep.subr.bf16.mxu0 0
    %1571 = vmatpush1.bf16.msra.mxu0 0
    %1572 = vmatprep.subr.bf16.mxu0 0
    %1573 = vmatpush1.bf16.msra.mxu0 %v860
    %1574 = vmatprep.subr.bf16.mxu0 0
    %1575 = vmatpush1.bf16.msra.mxu0 %v859
    %1576 = vmatprep.subr.bf16.mxu0 0
    %1577 = vmatpush2.bf16.msra.mxu0 0
    %1578 = vmatprep.subr.bf16.mxu0 0
    %1579 = vmatpush2.bf16.msra.mxu0 0
    %1580 = vmatprep.subr.bf16.mxu0 0
    %1581 = vmatpush2.bf16.msra.mxu0 0
    %1582 = vmatprep.subr.bf16.mxu0 0
    %1583 = vmatpush2.bf16.msra.mxu0 0
    %1584 = vmatprep.subr.bf16.mxu0 0
    %1585 = vmatpush2.bf16.msra.mxu0 0
    %1586 = vmatprep.subr.bf16.mxu0 0
    %1587 = vmatpush2.bf16.msra.mxu0 0
    %1588 = vmatprep.subr.bf16.mxu0 0
    %1589 = vmatpush2.bf16.msra.mxu0 0
    %1590 = vmatprep.subr.bf16.mxu0 0
    %1591 = vmatpush2.bf16.msra.mxu0 0
    %1592 = vmatprep.mubr.bf16.mxu0 0
    %1593 = vmatmul.mubr.bf16.gmra.mxu0 %v1558
    %v1594 = vpop.f32.mrf.mxu0
    %v1595 = vadd.f32 0.0, %v1594
    %v1596 = vpop.f32.mrf.mxu0
    %v1597 = vpop.f32.mrf.mxu0
    %v1598 = vpop.f32.mrf.mxu0
    %1599 = vdwg.mxu0
    %1600 = vmatprep.subr.bf16.mxu0 0
    %1601 = vmatpush1.bf16.msra.mxu0 0
    %1602 = vmatprep.subr.bf16.mxu0 0
    %1603 = vmatpush1.bf16.msra.mxu0 0
    %1604 = vmatprep.subr.bf16.mxu0 0
    %1605 = vmatpush1.bf16.msra.mxu0 0
    %1606 = vmatprep.subr.bf16.mxu0 0
    %1607 = vmatpush1.bf16.msra.mxu0 0
    %1608 = vmatprep.subr.bf16.mxu0 0
    %1609 = vmatpush1.bf16.msra.mxu0 0
    %1610 = vmatprep.subr.bf16.mxu0 0
    %1611 = vmatpush1.bf16.msra.mxu0 0
    %1612 = vmatprep.subr.bf16.mxu0 0
    %1613 = vmatpush1.bf16.msra.mxu0 %v915
    %1614 = vmatprep.subr.bf16.mxu0 0
    %1615 = vmatpush1.bf16.msra.mxu0 %v914
    %1616 = vmatprep.subr.bf16.mxu0 0
    %1617 = vmatpush2.bf16.msra.mxu0 0
    %1618 = vmatprep.subr.bf16.mxu0 0
    %1619 = vmatpush2.bf16.msra.mxu0 0
    %1620 = vmatprep.subr.bf16.mxu0 0
    %1621 = vmatpush2.bf16.msra.mxu0 0
    %1622 = vmatprep.subr.bf16.mxu0 0
    %1623 = vmatpush2.bf16.msra.mxu0 0
    %1624 = vmatprep.subr.bf16.mxu0 0
    %1625 = vmatpush2.bf16.msra.mxu0 0
    %1626 = vmatprep.subr.bf16.mxu0 0
    %1627 = vmatpush2.bf16.msra.mxu0 0
    %1628 = vmatprep.subr.bf16.mxu0 0
    %1629 = vmatpush2.bf16.msra.mxu0 0
    %1630 = vmatprep.subr.bf16.mxu0 0
    %1631 = vmatpush2.bf16.msra.mxu0 0
    %1632 = vmatprep.mubr.bf16.mxu0 0
    %1633 = vmatmul.mubr.bf16.gmra.mxu0 %v770
    %v1634 = vpop.f32.mrf.mxu0
    %v1635 = vadd.f32 %v1595, %v1634
    %v1636 = vpop.f32.mrf.mxu0
    %v1637 = vpop.f32.mrf.mxu0
    %v1638 = vpop.f32.mrf.mxu0
    %1639 = vdwg.mxu0
    %v1640 = vadd.f32 %v1635, %v962
    %v1641 = vxor.u32 %v1640, 2147483648
    %v1642 = vmul.f32 %v1641, 1.442695
    %v1643 = vpow.pop %v1642
    %v1644 = vadd.f32 %v1643, 1.0
    %v1645 = vrcp.pop %v1644
    %v1646 = vmul.f32 1.0, %v1645
    %v1647 = vtanh.pop %v1640
    %v1648 = vmul.f32 %v1646, %v1546
    %1650 = vrot.lane.b32.xlu0 %v1647, 64
    %v1651 = vpop.permute.xlu0 %1650
    %v1653 = vmul.f32 %v1646, %v1651
    %1655 = vrot.lane.b32.xlu0 %v1653, 32
    %v1656 = vpop.permute.xlu0 %1655
    %v1658 = vadd.f32 %v1648, %v1656
    %v1659 = vtanh.pop %v1658
    %1661 = vrot.lane.b32.xlu0 %v1659, 64
    %v1662 = vpop.permute.xlu0 %1661
    %v1664 = vmul.f32 %v1646, %v1662
    %v1665 = vpack.c.bf16 %v836, %v836
    %v1666 = vpack.c.bf16 %v1664, %v1664
    %1668 = vrot.lane.b32.xlu0 %v1666, 32
    %v1669 = vpop.permute.xlu0 %1668
    %v1671 = vsel %vm260, %v1669, 0
    %1673 = vmatprep.subr.bf16.mxu0 0
    %1674 = vmatpush1.bf16.msra.mxu0 0
    %1675 = vmatprep.subr.bf16.mxu0 0
    %1676 = vmatpush1.bf16.msra.mxu0 0
    %1677 = vmatprep.subr.bf16.mxu0 0
    %1678 = vmatpush1.bf16.msra.mxu0 0
    %1679 = vmatprep.subr.bf16.mxu0 0
    %1680 = vmatpush1.bf16.msra.mxu0 0
    %1681 = vmatprep.subr.bf16.mxu0 0
    %1682 = vmatpush1.bf16.msra.mxu0 0
    %1683 = vmatprep.subr.bf16.mxu0 0
    %1684 = vmatpush1.bf16.msra.mxu0 0
    %1685 = vmatprep.subr.bf16.mxu0 0
    %1686 = vmatpush1.bf16.msra.mxu0 %v860
    %1687 = vmatprep.subr.bf16.mxu0 0
    %1688 = vmatpush1.bf16.msra.mxu0 %v859
    %1689 = vmatprep.subr.bf16.mxu0 0
    %1690 = vmatpush2.bf16.msra.mxu0 0
    %1691 = vmatprep.subr.bf16.mxu0 0
    %1692 = vmatpush2.bf16.msra.mxu0 0
    %1693 = vmatprep.subr.bf16.mxu0 0
    %1694 = vmatpush2.bf16.msra.mxu0 0
    %1695 = vmatprep.subr.bf16.mxu0 0
    %1696 = vmatpush2.bf16.msra.mxu0 0
    %1697 = vmatprep.subr.bf16.mxu0 0
    %1698 = vmatpush2.bf16.msra.mxu0 0
    %1699 = vmatprep.subr.bf16.mxu0 0
    %1700 = vmatpush2.bf16.msra.mxu0 0
    %1701 = vmatprep.subr.bf16.mxu0 0
    %1702 = vmatpush2.bf16.msra.mxu0 0
    %1703 = vmatprep.subr.bf16.mxu0 0
    %1704 = vmatpush2.bf16.msra.mxu0 0
    %1705 = vmatprep.mubr.bf16.mxu0 0
    %1706 = vmatmul.mubr.bf16.gmra.mxu0 %v1671
    %v1707 = vpop.f32.mrf.mxu0
    %v1708 = vadd.f32 0.0, %v1707
    %v1709 = vpop.f32.mrf.mxu0
    %v1710 = vpop.f32.mrf.mxu0
    %v1711 = vpop.f32.mrf.mxu0
    %1712 = vdwg.mxu0
    %1714 = vrot.lane.b32.xlu0 %v1665, 32
    %v1715 = vpop.permute.xlu0 %1714
    %v1717 = vsel %vm260, %v1715, 0
    %1719 = vmatprep.subr.bf16.mxu0 0
    %1720 = vmatpush1.bf16.msra.mxu0 0
    %1721 = vmatprep.subr.bf16.mxu0 0
    %1722 = vmatpush1.bf16.msra.mxu0 0
    %1723 = vmatprep.subr.bf16.mxu0 0
    %1724 = vmatpush1.bf16.msra.mxu0 0
    %1725 = vmatprep.subr.bf16.mxu0 0
    %1726 = vmatpush1.bf16.msra.mxu0 0
    %1727 = vmatprep.subr.bf16.mxu0 0
    %1728 = vmatpush1.bf16.msra.mxu0 0
    %1729 = vmatprep.subr.bf16.mxu0 0
    %1730 = vmatpush1.bf16.msra.mxu0 0
    %1731 = vmatprep.subr.bf16.mxu0 0
    %1732 = vmatpush1.bf16.msra.mxu0 %v915
    %1733 = vmatprep.subr.bf16.mxu0 0
    %1734 = vmatpush1.bf16.msra.mxu0 %v914
    %1735 = vmatprep.subr.bf16.mxu0 0
    %1736 = vmatpush2.bf16.msra.mxu0 0
    %1737 = vmatprep.subr.bf16.mxu0 0
    %1738 = vmatpush2.bf16.msra.mxu0 0
    %1739 = vmatprep.subr.bf16.mxu0 0
    %1740 = vmatpush2.bf16.msra.mxu0 0
    %1741 = vmatprep.subr.bf16.mxu0 0
    %1742 = vmatpush2.bf16.msra.mxu0 0
    %1743 = vmatprep.subr.bf16.mxu0 0
    %1744 = vmatpush2.bf16.msra.mxu0 0
    %1745 = vmatprep.subr.bf16.mxu0 0
    %1746 = vmatpush2.bf16.msra.mxu0 0
    %1747 = vmatprep.subr.bf16.mxu0 0
    %1748 = vmatpush2.bf16.msra.mxu0 0
    %1749 = vmatprep.subr.bf16.mxu0 0
    %1750 = vmatpush2.bf16.msra.mxu0 0
    %1751 = vmatprep.mubr.bf16.mxu0 0
    %1752 = vmatmul.mubr.bf16.gmra.mxu0 %v1717
    %v1753 = vpop.f32.mrf.mxu0
    %v1754 = vadd.f32 %v1708, %v1753
    %v1755 = vpop.f32.mrf.mxu0
    %v1756 = vpop.f32.mrf.mxu0
    %v1757 = vpop.f32.mrf.mxu0
    %1758 = vdwg.mxu0
    %v1759 = vadd.f32 %v1754, %v962
    %v1760 = vxor.u32 %v1759, 2147483648
    %v1761 = vmul.f32 %v1760, 1.442695
    %v1762 = vpow.pop %v1761
    %v1763 = vadd.f32 %v1762, 1.0
    %v1764 = vrcp.pop %v1763
    %v1765 = vmul.f32 1.0, %v1764
    %v1766 = vtanh.pop %v1759
    %v1767 = vmul.f32 %v1765, %v1658
    %1769 = vrot.lane.b32.xlu0 %v1766, 64
    %v1770 = vpop.permute.xlu0 %1769
    %v1772 = vmul.f32 %v1765, %v1770
    %1774 = vrot.lane.b32.xlu0 %v1772, 32
    %v1775 = vpop.permute.xlu0 %1774
    %v1777 = vadd.f32 %v1767, %v1775
    %v1778 = vtanh.pop %v1777
    %1780 = vrot.lane.b32.xlu0 %v1778, 64
    %v1781 = vpop.permute.xlu0 %1780
    %v1783 = vmul.f32 %v1765, %v1781
    %v1785 = vlaneseq
    %v1786 = vshrl.u32 %v1785, 7
    %v1787 = vsub.s32 0, %v1786
    %v1788 = vrot.slane %v118, %v1787
    %1791 = vrot.lane.b32.xlu0 %v1783, 32
    %v1792 = vpop.permute.xlu0 %1791
    %v1793 = vsel %vm260, %v1792, 0
    %1795 = vmatprep.subr.mxu0 0.0
    %1796 = vmatpush1.msra.mxu0 0.0
    %1797 = vmatprep.subr.mxu0 0.0
    %1798 = vmatpush1.msra.mxu0 0.0
    %1799 = vmatprep.subr.mxu0 0.0
    %1800 = vmatpush1.msra.mxu0 0.0
    %1801 = vmatprep.subr.mxu0 0.0
    %1802 = vmatpush1.msra.mxu0 0.0
    %1803 = vmatprep.subr.mxu0 0.0
    %1804 = vmatpush1.msra.mxu0 0.0
    %1805 = vmatprep.subr.mxu0 0.0
    %1806 = vmatpush1.msra.mxu0 0.0
    %1807 = vmatprep.subr.mxu0 0.0
    %1808 = vmatpush1.msra.mxu0 0.0
    %1809 = vmatprep.subr.mxu0 0.0
    %1810 = vmatpush1.msra.mxu0 0.0
    %1811 = vmatprep.subr.mxu0 0.0
    %1812 = vmatpush1.msra.mxu0 0.0
    %1813 = vmatprep.subr.mxu0 0.0
    %1814 = vmatpush1.msra.mxu0 0.0
    %1815 = vmatprep.subr.mxu0 0.0
    %1816 = vmatpush1.msra.mxu0 0.0
    %1817 = vmatprep.subr.mxu0 0.0
    %1818 = vmatpush1.msra.mxu0 0.0
    %1819 = vmatprep.subr.mxu0 0.0
    %1820 = vmatpush1.msra.mxu0 %v122
    %1821 = vmatprep.subr.mxu0 0.0
    %1822 = vmatpush1.msra.mxu0 %v121
    %1823 = vmatprep.subr.mxu0 0.0
    %1824 = vmatpush1.msra.mxu0 %v120
    %1825 = vmatprep.subr.mxu0 0.0
    %1826 = vmatpush1.msra.mxu0 %v119
    %1827 = vmatprep.subr.mxu0 0.0
    %1828 = vmatpush2.msra.mxu0 0.0
    %1829 = vmatprep.subr.mxu0 0.0
    %1830 = vmatpush2.msra.mxu0 0.0
    %1831 = vmatprep.subr.mxu0 0.0
    %1832 = vmatpush2.msra.mxu0 0.0
    %1833 = vmatprep.subr.mxu0 0.0
    %1834 = vmatpush2.msra.mxu0 0.0
    %1835 = vmatprep.subr.mxu0 0.0
    %1836 = vmatpush2.msra.mxu0 0.0
    %1837 = vmatprep.subr.mxu0 0.0
    %1838 = vmatpush2.msra.mxu0 0.0
    %1839 = vmatprep.subr.mxu0 0.0
    %1840 = vmatpush2.msra.mxu0 0.0
    %1841 = vmatprep.subr.mxu0 0.0
    %1842 = vmatpush2.msra.mxu0 0.0
    %1843 = vmatprep.subr.mxu0 0.0
    %1844 = vmatpush2.msra.mxu0 0.0
    %1845 = vmatprep.subr.mxu0 0.0
    %1846 = vmatpush2.msra.mxu0 0.0
    %1847 = vmatprep.subr.mxu0 0.0
    %1848 = vmatpush2.msra.mxu0 0.0
    %1849 = vmatprep.subr.mxu0 0.0
    %1850 = vmatpush2.msra.mxu0 0.0
    %1851 = vmatprep.subr.mxu0 0.0
    %1852 = vmatpush2.msra.mxu0 0.0
    %1853 = vmatprep.subr.mxu0 0.0
    %1854 = vmatpush2.msra.mxu0 0.0
    %1855 = vmatprep.subr.mxu0 0.0
    %1856 = vmatpush2.msra.mxu0 0.0
    %1857 = vmatprep.subr.mxu0 0.0
    %1858 = vmatpush2.msra.mxu0 0.0
    %1859 = vmatprep.mubr.f32.mxu0 0.0
    %1860 = vmatmul.mubr.f32.gmra.mxu0 %v1793
    %v1861 = vpop.f32.mrf.mxu0
    %v1862 = vadd.f32 %v1788, %v1861
    %v1863 = vpop.f32.mrf.mxu0
    %1864 = vdwg.mxu0
    %vm1865 = vcmask 211968
    %1866 = vst.msk [vmem:[#allocation13] sm:$0xff] %vm1865, %v1862
    // Predicated region
    $region70: #{tpu_custom_call.1} parent=1 // pred_check
      _
    $region71: #{tpu_custom_call.1} parent=1 // pred_check_branch
      %1868 = sbr.rel (0) target = $region73
    $region72: #{tpu_custom_call.1} parent=1 // pred_region
      %s1870 = ssub.s32 128, 128
      %1871 = vsyncadd [#allocation4], %s1870
      %s1873 = sshll.u32 [#allocation13], 4
      %s1874 = int_to_ptr.vmem [resolvable:$true] %s1873
      %1876 = dma.vmem_to_hbm [thread:$0]  %s1874, 128, %s11, [#allocation4]
    $region73: #{tpu_custom_call.1} parent=1 // pred_fallthru
      _
    // Predicated region
    $region74: #{tpu_custom_call.1} parent=1 // pred_check
      _
    $region75: #{tpu_custom_call.1} parent=1 // pred_check_branch
      %1878 = sbr.rel (0) target = $region77
    $region76: #{tpu_custom_call.1} parent=1 // pred_region
      %1879 = dma.done [#allocation4], 128
    $region77: #{tpu_custom_call.1} parent=1 // pred_fallthru
      _
    %1880 = vsyncpa [#allocation3], 1
    %1881 = vsyncpa [#allocation6], 1
    %1882 = vsyncpa [#allocation9], 1
    %1883 = vsyncpa [#allocation12], 1
    %1884 = vsyncpa [#allocation4], 1

</llo_original>
